<compile_context>
chip_gen: v6e
topology: v6e:2x2x1
jax: 0.10.0
libtpu: 0.0.40
codegen_flags: <defaults>
</compile_context>

<pallas_src>
import math
from functools import partial

import jax
import jax.numpy as jnp
from jax import lax
from jax.experimental import pallas as pl
from jax.experimental.pallas import tpu as pltpu


def rga_kernel(x_ref, wqkv_ref, bqkv_ref, wfc_ref, bfc_ref, g_ref, o_ref,
               *, n_head):
    """One batch element per grid step: fused QKV -> per-head rel-attention -> fc."""
    x = x_ref[0]                                   # (T, D) f32
    T, D = x.shape
    dh = D // n_head
    inv_sqrt_dh = 1.0 / math.sqrt(dh)

    # ---- fused Q/K/V projection: one bf16 MXU matmul, f32 accumulation ----
    xb = x.astype(jnp.bfloat16)
    qkv = jnp.dot(xb, wqkv_ref[...], preferred_element_type=jnp.float32)
    qkv = qkv + bqkv_ref[...]                      # (T, 3D) f32

    acc = jnp.zeros((T, D), jnp.float32)           # accumulates fc output

    for h in range(n_head):                        # static unroll (h=2 default)
        q_b = qkv[:, h * dh:(h + 1) * dh].astype(jnp.bfloat16)               # (T, dh)
        k_b = qkv[:, D + h * dh:D + (h + 1) * dh].astype(jnp.bfloat16)       # (T, dh)
        v_b = qkv[:, 2 * D + h * dh:2 * D + (h + 1) * dh].astype(jnp.bfloat16)

        # Q @ K^T without materializing a transpose: contract last dims.
        qkt = lax.dot_general(q_b, k_b, (((1,), (1,)), ((), ())),
                              preferred_element_type=jnp.float32)            # (T, T)

        # Relative logits Srel[l, j] = sum_d q[l, d] * G[d, l, j]  (f32, VPU).
        # G is pre-masked (zero for j > l), so no in-kernel masking is needed.
        srel = jnp.zeros((T, T), jnp.float32)
        for d in range(dh):                        # static unroll over head dim
            col = h * dh + d
            srel = srel + qkv[:, col:col + 1] * g_ref[d]
        # TODO(synk): a production kernel would compute QE = q @ E^T on the MXU
        # and skew it with a strided pltpu.roll instead of this VPU accumulate.

        logits = (qkt + srel) * inv_sqrt_dh
        # TODO(synk): optional additive `mask` / `selfsim` inputs of the
        # reference forward are not threaded through (defaults None / False).

        # ---- softmax in f32; reciprocal on the EUP slot ----
        m = jnp.max(logits, axis=-1, keepdims=True)
        p = jnp.exp(logits - m)
        denom = jnp.sum(p, axis=-1, keepdims=True)
        attn = p * pl.reciprocal(denom, approx=True)                         # (T, T)

        # attention @ V  (bf16 operands, f32 accumulation)
        ctx = jnp.dot(attn.astype(jnp.bfloat16), v_b,
                      preferred_element_type=jnp.float32)                    # (T, dh)

        # Fold this head's slice of the output projection straight into the
        # accumulator -> no concatenate over heads.
        w_fc_h = wfc_ref[h * dh:(h + 1) * dh, :]                             # (dh, D) bf16
        acc = acc + jnp.dot(ctx.astype(jnp.bfloat16), w_fc_h,
                            preferred_element_type=jnp.float32)

    o_ref[0] = acc + bfc_ref[...]                  # (T, D) f32


def relative_global_attention(x, params, n_head):
    B, T, D = x.shape
    dh = D // n_head
    E = params["E"]                                # (max_seq, dh) f32
    max_seq = E.shape[0]
    assert T <= max_seq, "len_q must be <= max_seq for this kernel"

    # Pre-gather the relative embeddings into the skewed, masked layout
    # G[d, l, j] = E[max_seq - T + (T-1-l+j), d] if j <= l else 0.
    # Data-independent, so computed once outside the kernel; numerically
    # identical to the reference's _qe_masking + _skewing.
    Es = E[max_seq - T:, :]                        # (T, dh)
    l_idx = jnp.arange(T)[:, None]
    j_idx = jnp.arange(T)[None, :]
    src = jnp.clip(T - 1 - l_idx + j_idx, 0, T - 1)
    G = jnp.where((j_idx <= l_idx)[..., None], Es[src], 0.0)   # (T, T, dh) f32
    G = jnp.transpose(G, (2, 0, 1))                            # (dh, T, T) f32

    # Weights as bf16 (MXU-native, half the VMEM residency); biases in f32.
    wqkv = params["wqkv"].astype(jnp.bfloat16)     # (D, 3D)
    bqkv = params["bqkv"].astype(jnp.float32)      # (1, 3D)
    wfc = params["wfc"].astype(jnp.bfloat16)       # (D, D)
    bfc = params["bfc"].astype(jnp.float32)        # (1, D)

    operands = (x, wqkv, bqkv, wfc, bfc, G)

    # Explicit scoped-VMEM budget: weights + G + double-buffered in/out blocks,
    # with generous headroom; clamped to stay within every generation's VMEM.
    resident = sum(int(a.size) * a.dtype.itemsize for a in operands[1:])
    resident += 4 * T * D * 4                      # 2x in + 2x out block buffers
    vmem_limit = int(min(max(8 * resident, 16 * 1024 * 1024), 64 * 1024 * 1024))

    def const_spec(a):
        nd = a.ndim
        return pl.BlockSpec(a.shape, lambda b, _nd=nd: (0,) * _nd)

    in_specs = [pl.BlockSpec((1, T, D), lambda b: (b, 0, 0))] + \
               [const_spec(a) for a in operands[1:]]

    return pl.pallas_call(
        partial(rga_kernel, n_head=n_head),
        out_shape=jax.ShapeDtypeStruct((B, T, D), jnp.float32),
        grid=(B,),
        in_specs=in_specs,
        out_specs=pl.BlockSpec((1, T, D), lambda b: (b, 0, 0)),
        compiler_params=pltpu.CompilerParams(
            dimension_semantics=("parallel",),
            vmem_limit_bytes=vmem_limit),
    )(*operands)


def init_params(key, d, n_head, max_seq):
    """Deterministic parameters matching RelativeGlobalAttention.__init__ shapes.

    Linear weights are stored pre-transposed as (in_features, out_features);
    the Q/K/V weights and biases are packed into a single (d, 3d) / (1, 3d).
    """
    ks = jax.random.split(key, 5)
    s = 0.02

    def lin(k, fin, fout):
        kw, kb = jax.random.split(k)
        return (jax.random.normal(kw, (fin, fout), jnp.float32) * s,
                jax.random.normal(kb, (1, fout), jnp.float32) * s)

    wq, bq = lin(ks[0], d, d)
    wk, bk = lin(ks[1], d, d)
    wv, bv = lin(ks[2], d, d)
    wfc, bfc = lin(ks[3], d, d)
    E = jax.random.uniform(ks[4], (max_seq, d // n_head), jnp.float32)  # torch.rand

    return {
        "wqkv": jnp.concatenate([wq, wk, wv], axis=1),   # (d, 3d)
        "bqkv": jnp.concatenate([bq, bk, bv], axis=1),   # (1, 3d)
        "wfc": wfc, "bfc": bfc,                          # (d, d), (1, d)
        "E": E,                                          # (max_seq, dh)
    }


if __name__ == "__main__":
    # Module defaults: h=2 heads, d=64 channels, max_seq=300.  Small demo seq.
    B, T, D, H, MAX_SEQ = 2, 16, 64, 2, 300
    key = jax.random.PRNGKey(0)
    kx, kp = jax.random.split(key)

    x = jax.random.normal(kx, (B, T, D), jnp.float32)
    params = init_params(kp, D, H, MAX_SEQ)

    out = relative_global_attention(x, params, n_head=H)
    out = jax.block_until_ready(out)

    assert out.shape == (B, T, D) and out.dtype == jnp.float32
    assert bool(jnp.all(jnp.isfinite(out)))
    print("KERNEL_OK")
</pallas_src>

<mosaic_0001>
module attributes {stable_mosaic.version = 11 : i64} {
  func.func @rga_kernel(%arg0: i32, %arg1: memref<1x16x64xf32, #tpu.memory_space<vmem>>, %arg2: memref<64x192xbf16, #tpu.memory_space<vmem>>, %arg3: memref<1x192xf32, #tpu.memory_space<vmem>>, %arg4: memref<64x64xbf16, #tpu.memory_space<vmem>>, %arg5: memref<1x64xf32, #tpu.memory_space<vmem>>, %arg6: memref<32x16x16xf32, #tpu.memory_space<vmem>>, %arg7: memref<1x16x64xf32, #tpu.memory_space<vmem>>) attributes {dimension_semantics = [#tpu.dimension_semantics<parallel>], iteration_bounds = array<i64: 2>, scalar_prefetch = 0 : i64, scratch_operands = 0 : i64, tpu.core_type = #tpu.core_type<tc>, window_params = [{transform_indices = @transform_0, window_bounds = array<i64: 1, 16, 64>}, {pipeline_mode = #tpu.pipeline_mode<synchronous>, transform_indices = @transform_1, window_bounds = array<i64: 64, 192>}, {pipeline_mode = #tpu.pipeline_mode<synchronous>, transform_indices = @transform_2, window_bounds = array<i64: 1, 192>}, {pipeline_mode = #tpu.pipeline_mode<synchronous>, transform_indices = @transform_3, window_bounds = array<i64: 64, 64>}, {pipeline_mode = #tpu.pipeline_mode<synchronous>, transform_indices = @transform_4, window_bounds = array<i64: 1, 64>}, {pipeline_mode = #tpu.pipeline_mode<synchronous>, transform_indices = @transform_5, window_bounds = array<i64: 32, 16, 16>}, {transform_indices = @transform_6, window_bounds = array<i64: 1, 16, 64>}]} {
    %c0 = arith.constant 0 : index
    %c0_0 = arith.constant 0 : index
    %c0_1 = arith.constant 0 : index
    %0 = vector.load %arg1[%c0, %c0_0, %c0_1] : memref<1x16x64xf32, #tpu.memory_space<vmem>>, vector<1x16x64xf32>
    %1 = vector.shape_cast %0 : vector<1x16x64xf32> to vector<16x64xf32>
    %2 = arith.truncf %1 : vector<16x64xf32> to vector<16x64xbf16>
    %c0_2 = arith.constant 0 : index
    %c0_3 = arith.constant 0 : index
    %3 = vector.load %arg2[%c0_2, %c0_3] : memref<64x192xbf16, #tpu.memory_space<vmem>>, vector<64x192xbf16>
    %cst = arith.constant dense<0.000000e+00> : vector<16x192xf32>
    %4 = tpu.matmul %2, %3, %cst {dimension_numbers = #tpu.dot_dimension_numbers<[1], [0], [0], [1], [0, 0, 1, 1], [], []>} : vector<16x64xbf16>, vector<64x192xbf16>, vector<16x192xf32> -> vector<16x192xf32>
    %c0_4 = arith.constant 0 : index
    %c0_5 = arith.constant 0 : index
    %5 = vector.load %arg3[%c0_4, %c0_5] : memref<1x192xf32, #tpu.memory_space<vmem>>, vector<1x192xf32>
    %6 = vector.broadcast %5 : vector<1x192xf32> to vector<16x192xf32>
    %7 = arith.addf %4, %6 : vector<16x192xf32>
    %cst_6 = arith.constant 0.000000e+00 : f32
    %8 = vector.broadcast %cst_6 : f32 to vector<16x64xf32>
    %9 = vector.extract_strided_slice %7 {offsets = [0, 0], sizes = [16, 32], strides = [1, 1]} : vector<16x192xf32> to vector<16x32xf32>
    %10 = arith.truncf %9 : vector<16x32xf32> to vector<16x32xbf16>
    %11 = vector.extract_strided_slice %7 {offsets = [0, 64], sizes = [16, 32], strides = [1, 1]} : vector<16x192xf32> to vector<16x32xf32>
    %12 = arith.truncf %11 : vector<16x32xf32> to vector<16x32xbf16>
    %13 = vector.extract_strided_slice %7 {offsets = [0, 128], sizes = [16, 32], strides = [1, 1]} : vector<16x192xf32> to vector<16x32xf32>
    %14 = arith.truncf %13 : vector<16x32xf32> to vector<16x32xbf16>
    %cst_7 = arith.constant dense<0.000000e+00> : vector<16x16xf32>
    %15 = tpu.matmul %10, %12, %cst_7 {dimension_numbers = #tpu.dot_dimension_numbers<[1], [1], [0], [0], [0, 0, 1, 0], [], []>} : vector<16x32xbf16>, vector<16x32xbf16>, vector<16x16xf32> -> vector<16x16xf32>
    %cst_8 = arith.constant 0.000000e+00 : f32
    %16 = vector.broadcast %cst_8 : f32 to vector<16x16xf32>
    %17 = vector.extract_strided_slice %7 {offsets = [0, 0], sizes = [16, 1], strides = [1, 1]} : vector<16x192xf32> to vector<16x1xf32>
    %c0_9 = arith.constant 0 : index
    %c0_10 = arith.constant 0 : index
    %c0_11 = arith.constant 0 : index
    %18 = vector.load %arg6[%c0_9, %c0_10, %c0_11] : memref<32x16x16xf32, #tpu.memory_space<vmem>>, vector<1x16x16xf32>
    %19 = vector.shape_cast %18 : vector<1x16x16xf32> to vector<16x16xf32>
    %20 = vector.broadcast %17 : vector<16x1xf32> to vector<16x16xf32>
    %21 = arith.mulf %20, %19 : vector<16x16xf32>
    %22 = arith.addf %16, %21 : vector<16x16xf32>
    %23 = vector.extract_strided_slice %7 {offsets = [0, 1], sizes = [16, 1], strides = [1, 1]} : vector<16x192xf32> to vector<16x1xf32>
    %c1 = arith.constant 1 : index
    %c0_12 = arith.constant 0 : index
    %c0_13 = arith.constant 0 : index
    %24 = vector.load %arg6[%c1, %c0_12, %c0_13] : memref<32x16x16xf32, #tpu.memory_space<vmem>>, vector<1x16x16xf32>
    %25 = vector.shape_cast %24 : vector<1x16x16xf32> to vector<16x16xf32>
    %26 = vector.broadcast %23 : vector<16x1xf32> to vector<16x16xf32>
    %27 = arith.mulf %26, %25 : vector<16x16xf32>
    %28 = arith.addf %22, %27 : vector<16x16xf32>
    %29 = vector.extract_strided_slice %7 {offsets = [0, 2], sizes = [16, 1], strides = [1, 1]} : vector<16x192xf32> to vector<16x1xf32>
    %c2 = arith.constant 2 : index
    %c0_14 = arith.constant 0 : index
    %c0_15 = arith.constant 0 : index
    %30 = vector.load %arg6[%c2, %c0_14, %c0_15] : memref<32x16x16xf32, #tpu.memory_space<vmem>>, vector<1x16x16xf32>
    %31 = vector.shape_cast %30 : vector<1x16x16xf32> to vector<16x16xf32>
    %32 = vector.broadcast %29 : vector<16x1xf32> to vector<16x16xf32>
    %33 = arith.mulf %32, %31 : vector<16x16xf32>
    %34 = arith.addf %28, %33 : vector<16x16xf32>
    %35 = vector.extract_strided_slice %7 {offsets = [0, 3], sizes = [16, 1], strides = [1, 1]} : vector<16x192xf32> to vector<16x1xf32>
    %c3 = arith.constant 3 : index
    %c0_16 = arith.constant 0 : index
    %c0_17 = arith.constant 0 : index
    %36 = vector.load %arg6[%c3, %c0_16, %c0_17] : memref<32x16x16xf32, #tpu.memory_space<vmem>>, vector<1x16x16xf32>
    %37 = vector.shape_cast %36 : vector<1x16x16xf32> to vector<16x16xf32>
    %38 = vector.broadcast %35 : vector<16x1xf32> to vector<16x16xf32>
    %39 = arith.mulf %38, %37 : vector<16x16xf32>
    %40 = arith.addf %34, %39 : vector<16x16xf32>
    %41 = vector.extract_strided_slice %7 {offsets = [0, 4], sizes = [16, 1], strides = [1, 1]} : vector<16x192xf32> to vector<16x1xf32>
    %c4 = arith.constant 4 : index
    %c0_18 = arith.constant 0 : index
    %c0_19 = arith.constant 0 : index
    %42 = vector.load %arg6[%c4, %c0_18, %c0_19] : memref<32x16x16xf32, #tpu.memory_space<vmem>>, vector<1x16x16xf32>
    %43 = vector.shape_cast %42 : vector<1x16x16xf32> to vector<16x16xf32>
    %44 = vector.broadcast %41 : vector<16x1xf32> to vector<16x16xf32>
    %45 = arith.mulf %44, %43 : vector<16x16xf32>
    %46 = arith.addf %40, %45 : vector<16x16xf32>
    %47 = vector.extract_strided_slice %7 {offsets = [0, 5], sizes = [16, 1], strides = [1, 1]} : vector<16x192xf32> to vector<16x1xf32>
    %c5 = arith.constant 5 : index
    %c0_20 = arith.constant 0 : index
    %c0_21 = arith.constant 0 : index
    %48 = vector.load %arg6[%c5, %c0_20, %c0_21] : memref<32x16x16xf32, #tpu.memory_space<vmem>>, vector<1x16x16xf32>
    %49 = vector.shape_cast %48 : vector<1x16x16xf32> to vector<16x16xf32>
    %50 = vector.broadcast %47 : vector<16x1xf32> to vector<16x16xf32>
    %51 = arith.mulf %50, %49 : vector<16x16xf32>
    %52 = arith.addf %46, %51 : vector<16x16xf32>
    %53 = vector.extract_strided_slice %7 {offsets = [0, 6], sizes = [16, 1], strides = [1, 1]} : vector<16x192xf32> to vector<16x1xf32>
    %c6 = arith.constant 6 : index
    %c0_22 = arith.constant 0 : index
    %c0_23 = arith.constant 0 : index
    %54 = vector.load %arg6[%c6, %c0_22, %c0_23] : memref<32x16x16xf32, #tpu.memory_space<vmem>>, vector<1x16x16xf32>
    %55 = vector.shape_cast %54 : vector<1x16x16xf32> to vector<16x16xf32>
    %56 = vector.broadcast %53 : vector<16x1xf32> to vector<16x16xf32>
    %57 = arith.mulf %56, %55 : vector<16x16xf32>
    %58 = arith.addf %52, %57 : vector<16x16xf32>
    %59 = vector.extract_strided_slice %7 {offsets = [0, 7], sizes = [16, 1], strides = [1, 1]} : vector<16x192xf32> to vector<16x1xf32>
    %c7 = arith.constant 7 : index
    %c0_24 = arith.constant 0 : index
    %c0_25 = arith.constant 0 : index
    %60 = vector.load %arg6[%c7, %c0_24, %c0_25] : memref<32x16x16xf32, #tpu.memory_space<vmem>>, vector<1x16x16xf32>
    %61 = vector.shape_cast %60 : vector<1x16x16xf32> to vector<16x16xf32>
    %62 = vector.broadcast %59 : vector<16x1xf32> to vector<16x16xf32>
    %63 = arith.mulf %62, %61 : vector<16x16xf32>
    %64 = arith.addf %58, %63 : vector<16x16xf32>
    %65 = vector.extract_strided_slice %7 {offsets = [0, 8], sizes = [16, 1], strides = [1, 1]} : vector<16x192xf32> to vector<16x1xf32>
    %c8 = arith.constant 8 : index
    %c0_26 = arith.constant 0 : index
    %c0_27 = arith.constant 0 : index
    %66 = vector.load %arg6[%c8, %c0_26, %c0_27] : memref<32x16x16xf32, #tpu.memory_space<vmem>>, vector<1x16x16xf32>
    %67 = vector.shape_cast %66 : vector<1x16x16xf32> to vector<16x16xf32>
    %68 = vector.broadcast %65 : vector<16x1xf32> to vector<16x16xf32>
    %69 = arith.mulf %68, %67 : vector<16x16xf32>
    %70 = arith.addf %64, %69 : vector<16x16xf32>
    %71 = vector.extract_strided_slice %7 {offsets = [0, 9], sizes = [16, 1], strides = [1, 1]} : vector<16x192xf32> to vector<16x1xf32>
    %c9 = arith.constant 9 : index
    %c0_28 = arith.constant 0 : index
    %c0_29 = arith.constant 0 : index
    %72 = vector.load %arg6[%c9, %c0_28, %c0_29] : memref<32x16x16xf32, #tpu.memory_space<vmem>>, vector<1x16x16xf32>
    %73 = vector.shape_cast %72 : vector<1x16x16xf32> to vector<16x16xf32>
    %74 = vector.broadcast %71 : vector<16x1xf32> to vector<16x16xf32>
    %75 = arith.mulf %74, %73 : vector<16x16xf32>
    %76 = arith.addf %70, %75 : vector<16x16xf32>
    %77 = vector.extract_strided_slice %7 {offsets = [0, 10], sizes = [16, 1], strides = [1, 1]} : vector<16x192xf32> to vector<16x1xf32>
    %c10 = arith.constant 10 : index
    %c0_30 = arith.constant 0 : index
    %c0_31 = arith.constant 0 : index
    %78 = vector.load %arg6[%c10, %c0_30, %c0_31] : memref<32x16x16xf32, #tpu.memory_space<vmem>>, vector<1x16x16xf32>
    %79 = vector.shape_cast %78 : vector<1x16x16xf32> to vector<16x16xf32>
    %80 = vector.broadcast %77 : vector<16x1xf32> to vector<16x16xf32>
    %81 = arith.mulf %80, %79 : vector<16x16xf32>
    %82 = arith.addf %76, %81 : vector<16x16xf32>
    %83 = vector.extract_strided_slice %7 {offsets = [0, 11], sizes = [16, 1], strides = [1, 1]} : vector<16x192xf32> to vector<16x1xf32>
    %c11 = arith.constant 11 : index
    %c0_32 = arith.constant 0 : index
    %c0_33 = arith.constant 0 : index
    %84 = vector.load %arg6[%c11, %c0_32, %c0_33] : memref<32x16x16xf32, #tpu.memory_space<vmem>>, vector<1x16x16xf32>
    %85 = vector.shape_cast %84 : vector<1x16x16xf32> to vector<16x16xf32>
    %86 = vector.broadcast %83 : vector<16x1xf32> to vector<16x16xf32>
    %87 = arith.mulf %86, %85 : vector<16x16xf32>
    %88 = arith.addf %82, %87 : vector<16x16xf32>
    %89 = vector.extract_strided_slice %7 {offsets = [0, 12], sizes = [16, 1], strides = [1, 1]} : vector<16x192xf32> to vector<16x1xf32>
    %c12 = arith.constant 12 : index
    %c0_34 = arith.constant 0 : index
    %c0_35 = arith.constant 0 : index
    %90 = vector.load %arg6[%c12, %c0_34, %c0_35] : memref<32x16x16xf32, #tpu.memory_space<vmem>>, vector<1x16x16xf32>
    %91 = vector.shape_cast %90 : vector<1x16x16xf32> to vector<16x16xf32>
    %92 = vector.broadcast %89 : vector<16x1xf32> to vector<16x16xf32>
    %93 = arith.mulf %92, %91 : vector<16x16xf32>
    %94 = arith.addf %88, %93 : vector<16x16xf32>
    %95 = vector.extract_strided_slice %7 {offsets = [0, 13], sizes = [16, 1], strides = [1, 1]} : vector<16x192xf32> to vector<16x1xf32>
    %c13 = arith.constant 13 : index
    %c0_36 = arith.constant 0 : index
    %c0_37 = arith.constant 0 : index
    %96 = vector.load %arg6[%c13, %c0_36, %c0_37] : memref<32x16x16xf32, #tpu.memory_space<vmem>>, vector<1x16x16xf32>
    %97 = vector.shape_cast %96 : vector<1x16x16xf32> to vector<16x16xf32>
    %98 = vector.broadcast %95 : vector<16x1xf32> to vector<16x16xf32>
    %99 = arith.mulf %98, %97 : vector<16x16xf32>
    %100 = arith.addf %94, %99 : vector<16x16xf32>
    %101 = vector.extract_strided_slice %7 {offsets = [0, 14], sizes = [16, 1], strides = [1, 1]} : vector<16x192xf32> to vector<16x1xf32>
    %c14 = arith.constant 14 : index
    %c0_38 = arith.constant 0 : index
    %c0_39 = arith.constant 0 : index
    %102 = vector.load %arg6[%c14, %c0_38, %c0_39] : memref<32x16x16xf32, #tpu.memory_space<vmem>>, vector<1x16x16xf32>
    %103 = vector.shape_cast %102 : vector<1x16x16xf32> to vector<16x16xf32>
    %104 = vector.broadcast %101 : vector<16x1xf32> to vector<16x16xf32>
    %105 = arith.mulf %104, %103 : vector<16x16xf32>
    %106 = arith.addf %100, %105 : vector<16x16xf32>
    %107 = vector.extract_strided_slice %7 {offsets = [0, 15], sizes = [16, 1], strides = [1, 1]} : vector<16x192xf32> to vector<16x1xf32>
    %c15 = arith.constant 15 : index
    %c0_40 = arith.constant 0 : index
    %c0_41 = arith.constant 0 : index
    %108 = vector.load %arg6[%c15, %c0_40, %c0_41] : memref<32x16x16xf32, #tpu.memory_space<vmem>>, vector<1x16x16xf32>
    %109 = vector.shape_cast %108 : vector<1x16x16xf32> to vector<16x16xf32>
    %110 = vector.broadcast %107 : vector<16x1xf32> to vector<16x16xf32>
    %111 = arith.mulf %110, %109 : vector<16x16xf32>
    %112 = arith.addf %106, %111 : vector<16x16xf32>
    %113 = vector.extract_strided_slice %7 {offsets = [0, 16], sizes = [16, 1], strides = [1, 1]} : vector<16x192xf32> to vector<16x1xf32>
    %c16 = arith.constant 16 : index
    %c0_42 = arith.constant 0 : index
    %c0_43 = arith.constant 0 : index
    %114 = vector.load %arg6[%c16, %c0_42, %c0_43] : memref<32x16x16xf32, #tpu.memory_space<vmem>>, vector<1x16x16xf32>
    %115 = vector.shape_cast %114 : vector<1x16x16xf32> to vector<16x16xf32>
    %116 = vector.broadcast %113 : vector<16x1xf32> to vector<16x16xf32>
    %117 = arith.mulf %116, %115 : vector<16x16xf32>
    %118 = arith.addf %112, %117 : vector<16x16xf32>
    %119 = vector.extract_strided_slice %7 {offsets = [0, 17], sizes = [16, 1], strides = [1, 1]} : vector<16x192xf32> to vector<16x1xf32>
    %c17 = arith.constant 17 : index
    %c0_44 = arith.constant 0 : index
    %c0_45 = arith.constant 0 : index
    %120 = vector.load %arg6[%c17, %c0_44, %c0_45] : memref<32x16x16xf32, #tpu.memory_space<vmem>>, vector<1x16x16xf32>
    %121 = vector.shape_cast %120 : vector<1x16x16xf32> to vector<16x16xf32>
    %122 = vector.broadcast %119 : vector<16x1xf32> to vector<16x16xf32>
    %123 = arith.mulf %122, %121 : vector<16x16xf32>
    %124 = arith.addf %118, %123 : vector<16x16xf32>
    %125 = vector.extract_strided_slice %7 {offsets = [0, 18], sizes = [16, 1], strides = [1, 1]} : vector<16x192xf32> to vector<16x1xf32>
    %c18 = arith.constant 18 : index
    %c0_46 = arith.constant 0 : index
    %c0_47 = arith.constant 0 : index
    %126 = vector.load %arg6[%c18, %c0_46, %c0_47] : memref<32x16x16xf32, #tpu.memory_space<vmem>>, vector<1x16x16xf32>
    %127 = vector.shape_cast %126 : vector<1x16x16xf32> to vector<16x16xf32>
    %128 = vector.broadcast %125 : vector<16x1xf32> to vector<16x16xf32>
    %129 = arith.mulf %128, %127 : vector<16x16xf32>
    %130 = arith.addf %124, %129 : vector<16x16xf32>
    %131 = vector.extract_strided_slice %7 {offsets = [0, 19], sizes = [16, 1], strides = [1, 1]} : vector<16x192xf32> to vector<16x1xf32>
    %c19 = arith.constant 19 : index
    %c0_48 = arith.constant 0 : index
    %c0_49 = arith.constant 0 : index
    %132 = vector.load %arg6[%c19, %c0_48, %c0_49] : memref<32x16x16xf32, #tpu.memory_space<vmem>>, vector<1x16x16xf32>
    %133 = vector.shape_cast %132 : vector<1x16x16xf32> to vector<16x16xf32>
    %134 = vector.broadcast %131 : vector<16x1xf32> to vector<16x16xf32>
    %135 = arith.mulf %134, %133 : vector<16x16xf32>
    %136 = arith.addf %130, %135 : vector<16x16xf32>
    %137 = vector.extract_strided_slice %7 {offsets = [0, 20], sizes = [16, 1], strides = [1, 1]} : vector<16x192xf32> to vector<16x1xf32>
    %c20 = arith.constant 20 : index
    %c0_50 = arith.constant 0 : index
    %c0_51 = arith.constant 0 : index
    %138 = vector.load %arg6[%c20, %c0_50, %c0_51] : memref<32x16x16xf32, #tpu.memory_space<vmem>>, vector<1x16x16xf32>
    %139 = vector.shape_cast %138 : vector<1x16x16xf32> to vector<16x16xf32>
    %140 = vector.broadcast %137 : vector<16x1xf32> to vector<16x16xf32>
    %141 = arith.mulf %140, %139 : vector<16x16xf32>
    %142 = arith.addf %136, %141 : vector<16x16xf32>
    %143 = vector.extract_strided_slice %7 {offsets = [0, 21], sizes = [16, 1], strides = [1, 1]} : vector<16x192xf32> to vector<16x1xf32>
    %c21 = arith.constant 21 : index
    %c0_52 = arith.constant 0 : index
    %c0_53 = arith.constant 0 : index
    %144 = vector.load %arg6[%c21, %c0_52, %c0_53] : memref<32x16x16xf32, #tpu.memory_space<vmem>>, vector<1x16x16xf32>
    %145 = vector.shape_cast %144 : vector<1x16x16xf32> to vector<16x16xf32>
    %146 = vector.broadcast %143 : vector<16x1xf32> to vector<16x16xf32>
    %147 = arith.mulf %146, %145 : vector<16x16xf32>
    %148 = arith.addf %142, %147 : vector<16x16xf32>
    %149 = vector.extract_strided_slice %7 {offsets = [0, 22], sizes = [16, 1], strides = [1, 1]} : vector<16x192xf32> to vector<16x1xf32>
    %c22 = arith.constant 22 : index
    %c0_54 = arith.constant 0 : index
    %c0_55 = arith.constant 0 : index
    %150 = vector.load %arg6[%c22, %c0_54, %c0_55] : memref<32x16x16xf32, #tpu.memory_space<vmem>>, vector<1x16x16xf32>
    %151 = vector.shape_cast %150 : vector<1x16x16xf32> to vector<16x16xf32>
    %152 = vector.broadcast %149 : vector<16x1xf32> to vector<16x16xf32>
    %153 = arith.mulf %152, %151 : vector<16x16xf32>
    %154 = arith.addf %148, %153 : vector<16x16xf32>
    %155 = vector.extract_strided_slice %7 {offsets = [0, 23], sizes = [16, 1], strides = [1, 1]} : vector<16x192xf32> to vector<16x1xf32>
    %c23 = arith.constant 23 : index
    %c0_56 = arith.constant 0 : index
    %c0_57 = arith.constant 0 : index
    %156 = vector.load %arg6[%c23, %c0_56, %c0_57] : memref<32x16x16xf32, #tpu.memory_space<vmem>>, vector<1x16x16xf32>
    %157 = vector.shape_cast %156 : vector<1x16x16xf32> to vector<16x16xf32>
    %158 = vector.broadcast %155 : vector<16x1xf32> to vector<16x16xf32>
    %159 = arith.mulf %158, %157 : vector<16x16xf32>
    %160 = arith.addf %154, %159 : vector<16x16xf32>
    %161 = vector.extract_strided_slice %7 {offsets = [0, 24], sizes = [16, 1], strides = [1, 1]} : vector<16x192xf32> to vector<16x1xf32>
    %c24 = arith.constant 24 : index
    %c0_58 = arith.constant 0 : index
    %c0_59 = arith.constant 0 : index
    %162 = vector.load %arg6[%c24, %c0_58, %c0_59] : memref<32x16x16xf32, #tpu.memory_space<vmem>>, vector<1x16x16xf32>
    %163 = vector.shape_cast %162 : vector<1x16x16xf32> to vector<16x16xf32>
    %164 = vector.broadcast %161 : vector<16x1xf32> to vector<16x16xf32>
    %165 = arith.mulf %164, %163 : vector<16x16xf32>
    %166 = arith.addf %160, %165 : vector<16x16xf32>
    %167 = vector.extract_strided_slice %7 {offsets = [0, 25], sizes = [16, 1], strides = [1, 1]} : vector<16x192xf32> to vector<16x1xf32>
    %c25 = arith.constant 25 : index
    %c0_60 = arith.constant 0 : index
    %c0_61 = arith.constant 0 : index
    %168 = vector.load %arg6[%c25, %c0_60, %c0_61] : memref<32x16x16xf32, #tpu.memory_space<vmem>>, vector<1x16x16xf32>
    %169 = vector.shape_cast %168 : vector<1x16x16xf32> to vector<16x16xf32>
    %170 = vector.broadcast %167 : vector<16x1xf32> to vector<16x16xf32>
    %171 = arith.mulf %170, %169 : vector<16x16xf32>
    %172 = arith.addf %166, %171 : vector<16x16xf32>
    %173 = vector.extract_strided_slice %7 {offsets = [0, 26], sizes = [16, 1], strides = [1, 1]} : vector<16x192xf32> to vector<16x1xf32>
    %c26 = arith.constant 26 : index
    %c0_62 = arith.constant 0 : index
    %c0_63 = arith.constant 0 : index
    %174 = vector.load %arg6[%c26, %c0_62, %c0_63] : memref<32x16x16xf32, #tpu.memory_space<vmem>>, vector<1x16x16xf32>
    %175 = vector.shape_cast %174 : vector<1x16x16xf32> to vector<16x16xf32>
    %176 = vector.broadcast %173 : vector<16x1xf32> to vector<16x16xf32>
    %177 = arith.mulf %176, %175 : vector<16x16xf32>
    %178 = arith.addf %172, %177 : vector<16x16xf32>
    %179 = vector.extract_strided_slice %7 {offsets = [0, 27], sizes = [16, 1], strides = [1, 1]} : vector<16x192xf32> to vector<16x1xf32>
    %c27 = arith.constant 27 : index
    %c0_64 = arith.constant 0 : index
    %c0_65 = arith.constant 0 : index
    %180 = vector.load %arg6[%c27, %c0_64, %c0_65] : memref<32x16x16xf32, #tpu.memory_space<vmem>>, vector<1x16x16xf32>
    %181 = vector.shape_cast %180 : vector<1x16x16xf32> to vector<16x16xf32>
    %182 = vector.broadcast %179 : vector<16x1xf32> to vector<16x16xf32>
    %183 = arith.mulf %182, %181 : vector<16x16xf32>
    %184 = arith.addf %178, %183 : vector<16x16xf32>
    %185 = vector.extract_strided_slice %7 {offsets = [0, 28], sizes = [16, 1], strides = [1, 1]} : vector<16x192xf32> to vector<16x1xf32>
    %c28 = arith.constant 28 : index
    %c0_66 = arith.constant 0 : index
    %c0_67 = arith.constant 0 : index
    %186 = vector.load %arg6[%c28, %c0_66, %c0_67] : memref<32x16x16xf32, #tpu.memory_space<vmem>>, vector<1x16x16xf32>
    %187 = vector.shape_cast %186 : vector<1x16x16xf32> to vector<16x16xf32>
    %188 = vector.broadcast %185 : vector<16x1xf32> to vector<16x16xf32>
    %189 = arith.mulf %188, %187 : vector<16x16xf32>
    %190 = arith.addf %184, %189 : vector<16x16xf32>
    %191 = vector.extract_strided_slice %7 {offsets = [0, 29], sizes = [16, 1], strides = [1, 1]} : vector<16x192xf32> to vector<16x1xf32>
    %c29 = arith.constant 29 : index
    %c0_68 = arith.constant 0 : index
    %c0_69 = arith.constant 0 : index
    %192 = vector.load %arg6[%c29, %c0_68, %c0_69] : memref<32x16x16xf32, #tpu.memory_space<vmem>>, vector<1x16x16xf32>
    %193 = vector.shape_cast %192 : vector<1x16x16xf32> to vector<16x16xf32>
    %194 = vector.broadcast %191 : vector<16x1xf32> to vector<16x16xf32>
    %195 = arith.mulf %194, %193 : vector<16x16xf32>
    %196 = arith.addf %190, %195 : vector<16x16xf32>
    %197 = vector.extract_strided_slice %7 {offsets = [0, 30], sizes = [16, 1], strides = [1, 1]} : vector<16x192xf32> to vector<16x1xf32>
    %c30 = arith.constant 30 : index
    %c0_70 = arith.constant 0 : index
    %c0_71 = arith.constant 0 : index
    %198 = vector.load %arg6[%c30, %c0_70, %c0_71] : memref<32x16x16xf32, #tpu.memory_space<vmem>>, vector<1x16x16xf32>
    %199 = vector.shape_cast %198 : vector<1x16x16xf32> to vector<16x16xf32>
    %200 = vector.broadcast %197 : vector<16x1xf32> to vector<16x16xf32>
    %201 = arith.mulf %200, %199 : vector<16x16xf32>
    %202 = arith.addf %196, %201 : vector<16x16xf32>
    %203 = vector.extract_strided_slice %7 {offsets = [0, 31], sizes = [16, 1], strides = [1, 1]} : vector<16x192xf32> to vector<16x1xf32>
    %c31 = arith.constant 31 : index
    %c0_72 = arith.constant 0 : index
    %c0_73 = arith.constant 0 : index
    %204 = vector.load %arg6[%c31, %c0_72, %c0_73] : memref<32x16x16xf32, #tpu.memory_space<vmem>>, vector<1x16x16xf32>
    %205 = vector.shape_cast %204 : vector<1x16x16xf32> to vector<16x16xf32>
    %206 = vector.broadcast %203 : vector<16x1xf32> to vector<16x16xf32>
    %207 = arith.mulf %206, %205 : vector<16x16xf32>
    %208 = arith.addf %202, %207 : vector<16x16xf32>
    %209 = arith.addf %15, %208 : vector<16x16xf32>
    %cst_74 = arith.constant 0.176776692 : f32
    %210 = vector.broadcast %cst_74 : f32 to vector<16x16xf32>
    %211 = arith.mulf %209, %210 : vector<16x16xf32>
    %cst_75 = arith.constant dense<0xFF800000> : vector<16xf32>
    %212 = vector.multi_reduction <maximumf>, %211, %cst_75 [1] : vector<16x16xf32> to vector<16xf32>
    %213 = vector.shape_cast %212 : vector<16xf32> to vector<16x1xf32>
    %214 = vector.broadcast %213 : vector<16x1xf32> to vector<16x16xf32>
    %215 = arith.subf %211, %214 : vector<16x16xf32>
    %216 = math.exp %215 : vector<16x16xf32>
    %cst_76 = arith.constant dense<0.000000e+00> : vector<16xf32>
    %217 = vector.multi_reduction <add>, %216, %cst_76 [1] : vector<16x16xf32> to vector<16xf32>
    %218 = vector.shape_cast %217 : vector<16xf32> to vector<16x1xf32>
    %219 = tpu.reciprocal %218 {approx = true} : vector<16x1xf32> -> vector<16x1xf32>
    %220 = vector.broadcast %219 : vector<16x1xf32> to vector<16x16xf32>
    %221 = arith.mulf %216, %220 : vector<16x16xf32>
    %222 = arith.truncf %221 : vector<16x16xf32> to vector<16x16xbf16>
    %cst_77 = arith.constant dense<0.000000e+00> : vector<16x32xf32>
    %223 = tpu.matmul %222, %14, %cst_77 {dimension_numbers = #tpu.dot_dimension_numbers<[1], [0], [0], [1], [0, 0, 1, 1], [], []>} : vector<16x16xbf16>, vector<16x32xbf16>, vector<16x32xf32> -> vector<16x32xf32>
    %c0_78 = arith.constant 0 : index
    %c0_79 = arith.constant 0 : index
    %224 = vector.load %arg4[%c0_78, %c0_79] : memref<64x64xbf16, #tpu.memory_space<vmem>>, vector<32x64xbf16>
    %225 = arith.truncf %223 : vector<16x32xf32> to vector<16x32xbf16>
    %cst_80 = arith.constant dense<0.000000e+00> : vector<16x64xf32>
    %226 = tpu.matmul %225, %224, %cst_80 {dimension_numbers = #tpu.dot_dimension_numbers<[1], [0], [0], [1], [0, 0, 1, 1], [], []>} : vector<16x32xbf16>, vector<32x64xbf16>, vector<16x64xf32> -> vector<16x64xf32>
    %227 = arith.addf %8, %226 : vector<16x64xf32>
    %228 = vector.extract_strided_slice %7 {offsets = [0, 32], sizes = [16, 32], strides = [1, 1]} : vector<16x192xf32> to vector<16x32xf32>
    %229 = arith.truncf %228 : vector<16x32xf32> to vector<16x32xbf16>
    %230 = vector.extract_strided_slice %7 {offsets = [0, 96], sizes = [16, 32], strides = [1, 1]} : vector<16x192xf32> to vector<16x32xf32>
    %231 = arith.truncf %230 : vector<16x32xf32> to vector<16x32xbf16>
    %232 = vector.extract_strided_slice %7 {offsets = [0, 160], sizes = [16, 32], strides = [1, 1]} : vector<16x192xf32> to vector<16x32xf32>
    %233 = arith.truncf %232 : vector<16x32xf32> to vector<16x32xbf16>
    %cst_81 = arith.constant dense<0.000000e+00> : vector<16x16xf32>
    %234 = tpu.matmul %229, %231, %cst_81 {dimension_numbers = #tpu.dot_dimension_numbers<[1], [1], [0], [0], [0, 0, 1, 0], [], []>} : vector<16x32xbf16>, vector<16x32xbf16>, vector<16x16xf32> -> vector<16x16xf32>
    %cst_82 = arith.constant 0.000000e+00 : f32
    %235 = vector.broadcast %cst_82 : f32 to vector<16x16xf32>
    %236 = vector.extract_strided_slice %7 {offsets = [0, 32], sizes = [16, 1], strides = [1, 1]} : vector<16x192xf32> to vector<16x1xf32>
    %c0_83 = arith.constant 0 : index
    %c0_84 = arith.constant 0 : index
    %c0_85 = arith.constant 0 : index
    %237 = vector.load %arg6[%c0_83, %c0_84, %c0_85] : memref<32x16x16xf32, #tpu.memory_space<vmem>>, vector<1x16x16xf32>
    %238 = vector.shape_cast %237 : vector<1x16x16xf32> to vector<16x16xf32>
    %239 = vector.broadcast %236 : vector<16x1xf32> to vector<16x16xf32>
    %240 = arith.mulf %239, %238 : vector<16x16xf32>
    %241 = arith.addf %235, %240 : vector<16x16xf32>
    %242 = vector.extract_strided_slice %7 {offsets = [0, 33], sizes = [16, 1], strides = [1, 1]} : vector<16x192xf32> to vector<16x1xf32>
    %c1_86 = arith.constant 1 : index
    %c0_87 = arith.constant 0 : index
    %c0_88 = arith.constant 0 : index
    %243 = vector.load %arg6[%c1_86, %c0_87, %c0_88] : memref<32x16x16xf32, #tpu.memory_space<vmem>>, vector<1x16x16xf32>
    %244 = vector.shape_cast %243 : vector<1x16x16xf32> to vector<16x16xf32>
    %245 = vector.broadcast %242 : vector<16x1xf32> to vector<16x16xf32>
    %246 = arith.mulf %245, %244 : vector<16x16xf32>
    %247 = arith.addf %241, %246 : vector<16x16xf32>
    %248 = vector.extract_strided_slice %7 {offsets = [0, 34], sizes = [16, 1], strides = [1, 1]} : vector<16x192xf32> to vector<16x1xf32>
    %c2_89 = arith.constant 2 : index
    %c0_90 = arith.constant 0 : index
    %c0_91 = arith.constant 0 : index
    %249 = vector.load %arg6[%c2_89, %c0_90, %c0_91] : memref<32x16x16xf32, #tpu.memory_space<vmem>>, vector<1x16x16xf32>
    %250 = vector.shape_cast %249 : vector<1x16x16xf32> to vector<16x16xf32>
    %251 = vector.broadcast %248 : vector<16x1xf32> to vector<16x16xf32>
    %252 = arith.mulf %251, %250 : vector<16x16xf32>
    %253 = arith.addf %247, %252 : vector<16x16xf32>
    %254 = vector.extract_strided_slice %7 {offsets = [0, 35], sizes = [16, 1], strides = [1, 1]} : vector<16x192xf32> to vector<16x1xf32>
    %c3_92 = arith.constant 3 : index
    %c0_93 = arith.constant 0 : index
    %c0_94 = arith.constant 0 : index
    %255 = vector.load %arg6[%c3_92, %c0_93, %c0_94] : memref<32x16x16xf32, #tpu.memory_space<vmem>>, vector<1x16x16xf32>
    %256 = vector.shape_cast %255 : vector<1x16x16xf32> to vector<16x16xf32>
    %257 = vector.broadcast %254 : vector<16x1xf32> to vector<16x16xf32>
    %258 = arith.mulf %257, %256 : vector<16x16xf32>
    %259 = arith.addf %253, %258 : vector<16x16xf32>
    %260 = vector.extract_strided_slice %7 {offsets = [0, 36], sizes = [16, 1], strides = [1, 1]} : vector<16x192xf32> to vector<16x1xf32>
    %c4_95 = arith.constant 4 : index
    %c0_96 = arith.constant 0 : index
    %c0_97 = arith.constant 0 : index
    %261 = vector.load %arg6[%c4_95, %c0_96, %c0_97] : memref<32x16x16xf32, #tpu.memory_space<vmem>>, vector<1x16x16xf32>
    %262 = vector.shape_cast %261 : vector<1x16x16xf32> to vector<16x16xf32>
    %263 = vector.broadcast %260 : vector<16x1xf32> to vector<16x16xf32>
    %264 = arith.mulf %263, %262 : vector<16x16xf32>
    %265 = arith.addf %259, %264 : vector<16x16xf32>
    %266 = vector.extract_strided_slice %7 {offsets = [0, 37], sizes = [16, 1], strides = [1, 1]} : vector<16x192xf32> to vector<16x1xf32>
    %c5_98 = arith.constant 5 : index
    %c0_99 = arith.constant 0 : index
    %c0_100 = arith.constant 0 : index
    %267 = vector.load %arg6[%c5_98, %c0_99, %c0_100] : memref<32x16x16xf32, #tpu.memory_space<vmem>>, vector<1x16x16xf32>
    %268 = vector.shape_cast %267 : vector<1x16x16xf32> to vector<16x16xf32>
    %269 = vector.broadcast %266 : vector<16x1xf32> to vector<16x16xf32>
    %270 = arith.mulf %269, %268 : vector<16x16xf32>
    %271 = arith.addf %265, %270 : vector<16x16xf32>
    %272 = vector.extract_strided_slice %7 {offsets = [0, 38], sizes = [16, 1], strides = [1, 1]} : vector<16x192xf32> to vector<16x1xf32>
    %c6_101 = arith.constant 6 : index
    %c0_102 = arith.constant 0 : index
    %c0_103 = arith.constant 0 : index
    %273 = vector.load %arg6[%c6_101, %c0_102, %c0_103] : memref<32x16x16xf32, #tpu.memory_space<vmem>>, vector<1x16x16xf32>
    %274 = vector.shape_cast %273 : vector<1x16x16xf32> to vector<16x16xf32>
    %275 = vector.broadcast %272 : vector<16x1xf32> to vector<16x16xf32>
    %276 = arith.mulf %275, %274 : vector<16x16xf32>
    %277 = arith.addf %271, %276 : vector<16x16xf32>
    %278 = vector.extract_strided_slice %7 {offsets = [0, 39], sizes = [16, 1], strides = [1, 1]} : vector<16x192xf32> to vector<16x1xf32>
    %c7_104 = arith.constant 7 : index
    %c0_105 = arith.constant 0 : index
    %c0_106 = arith.constant 0 : index
    %279 = vector.load %arg6[%c7_104, %c0_105, %c0_106] : memref<32x16x16xf32, #tpu.memory_space<vmem>>, vector<1x16x16xf32>
    %280 = vector.shape_cast %279 : vector<1x16x16xf32> to vector<16x16xf32>
    %281 = vector.broadcast %278 : vector<16x1xf32> to vector<16x16xf32>
    %282 = arith.mulf %281, %280 : vector<16x16xf32>
    %283 = arith.addf %277, %282 : vector<16x16xf32>
    %284 = vector.extract_strided_slice %7 {offsets = [0, 40], sizes = [16, 1], strides = [1, 1]} : vector<16x192xf32> to vector<16x1xf32>
    %c8_107 = arith.constant 8 : index
    %c0_108 = arith.constant 0 : index
    %c0_109 = arith.constant 0 : index
    %285 = vector.load %arg6[%c8_107, %c0_108, %c0_109] : memref<32x16x16xf32, #tpu.memory_space<vmem>>, vector<1x16x16xf32>
    %286 = vector.shape_cast %285 : vector<1x16x16xf32> to vector<16x16xf32>
    %287 = vector.broadcast %284 : vector<16x1xf32> to vector<16x16xf32>
    %288 = arith.mulf %287, %286 : vector<16x16xf32>
    %289 = arith.addf %283, %288 : vector<16x16xf32>
    %290 = vector.extract_strided_slice %7 {offsets = [0, 41], sizes = [16, 1], strides = [1, 1]} : vector<16x192xf32> to vector<16x1xf32>
    %c9_110 = arith.constant 9 : index
    %c0_111 = arith.constant 0 : index
    %c0_112 = arith.constant 0 : index
    %291 = vector.load %arg6[%c9_110, %c0_111, %c0_112] : memref<32x16x16xf32, #tpu.memory_space<vmem>>, vector<1x16x16xf32>
    %292 = vector.shape_cast %291 : vector<1x16x16xf32> to vector<16x16xf32>
    %293 = vector.broadcast %290 : vector<16x1xf32> to vector<16x16xf32>
    %294 = arith.mulf %293, %292 : vector<16x16xf32>
    %295 = arith.addf %289, %294 : vector<16x16xf32>
    %296 = vector.extract_strided_slice %7 {offsets = [0, 42], sizes = [16, 1], strides = [1, 1]} : vector<16x192xf32> to vector<16x1xf32>
    %c10_113 = arith.constant 10 : index
    %c0_114 = arith.constant 0 : index
    %c0_115 = arith.constant 0 : index
    %297 = vector.load %arg6[%c10_113, %c0_114, %c0_115] : memref<32x16x16xf32, #tpu.memory_space<vmem>>, vector<1x16x16xf32>
    %298 = vector.shape_cast %297 : vector<1x16x16xf32> to vector<16x16xf32>
    %299 = vector.broadcast %296 : vector<16x1xf32> to vector<16x16xf32>
    %300 = arith.mulf %299, %298 : vector<16x16xf32>
    %301 = arith.addf %295, %300 : vector<16x16xf32>
    %302 = vector.extract_strided_slice %7 {offsets = [0, 43], sizes = [16, 1], strides = [1, 1]} : vector<16x192xf32> to vector<16x1xf32>
    %c11_116 = arith.constant 11 : index
    %c0_117 = arith.constant 0 : index
    %c0_118 = arith.constant 0 : index
    %303 = vector.load %arg6[%c11_116, %c0_117, %c0_118] : memref<32x16x16xf32, #tpu.memory_space<vmem>>, vector<1x16x16xf32>
    %304 = vector.shape_cast %303 : vector<1x16x16xf32> to vector<16x16xf32>
    %305 = vector.broadcast %302 : vector<16x1xf32> to vector<16x16xf32>
    %306 = arith.mulf %305, %304 : vector<16x16xf32>
    %307 = arith.addf %301, %306 : vector<16x16xf32>
    %308 = vector.extract_strided_slice %7 {offsets = [0, 44], sizes = [16, 1], strides = [1, 1]} : vector<16x192xf32> to vector<16x1xf32>
    %c12_119 = arith.constant 12 : index
    %c0_120 = arith.constant 0 : index
    %c0_121 = arith.constant 0 : index
    %309 = vector.load %arg6[%c12_119, %c0_120, %c0_121] : memref<32x16x16xf32, #tpu.memory_space<vmem>>, vector<1x16x16xf32>
    %310 = vector.shape_cast %309 : vector<1x16x16xf32> to vector<16x16xf32>
    %311 = vector.broadcast %308 : vector<16x1xf32> to vector<16x16xf32>
    %312 = arith.mulf %311, %310 : vector<16x16xf32>
    %313 = arith.addf %307, %312 : vector<16x16xf32>
    %314 = vector.extract_strided_slice %7 {offsets = [0, 45], sizes = [16, 1], strides = [1, 1]} : vector<16x192xf32> to vector<16x1xf32>
    %c13_122 = arith.constant 13 : index
    %c0_123 = arith.constant 0 : index
    %c0_124 = arith.constant 0 : index
    %315 = vector.load %arg6[%c13_122, %c0_123, %c0_124] : memref<32x16x16xf32, #tpu.memory_space<vmem>>, vector<1x16x16xf32>
    %316 = vector.shape_cast %315 : vector<1x16x16xf32> to vector<16x16xf32>
    %317 = vector.broadcast %314 : vector<16x1xf32> to vector<16x16xf32>
    %318 = arith.mulf %317, %316 : vector<16x16xf32>
    %319 = arith.addf %313, %318 : vector<16x16xf32>
    %320 = vector.extract_strided_slice %7 {offsets = [0, 46], sizes = [16, 1], strides = [1, 1]} : vector<16x192xf32> to vector<16x1xf32>
    %c14_125 = arith.constant 14 : index
    %c0_126 = arith.constant 0 : index
    %c0_127 = arith.constant 0 : index
    %321 = vector.load %arg6[%c14_125, %c0_126, %c0_127] : memref<32x16x16xf32, #tpu.memory_space<vmem>>, vector<1x16x16xf32>
    %322 = vector.shape_cast %321 : vector<1x16x16xf32> to vector<16x16xf32>
    %323 = vector.broadcast %320 : vector<16x1xf32> to vector<16x16xf32>
    %324 = arith.mulf %323, %322 : vector<16x16xf32>
    %325 = arith.addf %319, %324 : vector<16x16xf32>
    %326 = vector.extract_strided_slice %7 {offsets = [0, 47], sizes = [16, 1], strides = [1, 1]} : vector<16x192xf32> to vector<16x1xf32>
    %c15_128 = arith.constant 15 : index
    %c0_129 = arith.constant 0 : index
    %c0_130 = arith.constant 0 : index
    %327 = vector.load %arg6[%c15_128, %c0_129, %c0_130] : memref<32x16x16xf32, #tpu.memory_space<vmem>>, vector<1x16x16xf32>
    %328 = vector.shape_cast %327 : vector<1x16x16xf32> to vector<16x16xf32>
    %329 = vector.broadcast %326 : vector<16x1xf32> to vector<16x16xf32>
    %330 = arith.mulf %329, %328 : vector<16x16xf32>
    %331 = arith.addf %325, %330 : vector<16x16xf32>
    %332 = vector.extract_strided_slice %7 {offsets = [0, 48], sizes = [16, 1], strides = [1, 1]} : vector<16x192xf32> to vector<16x1xf32>
    %c16_131 = arith.constant 16 : index
    %c0_132 = arith.constant 0 : index
    %c0_133 = arith.constant 0 : index
    %333 = vector.load %arg6[%c16_131, %c0_132, %c0_133] : memref<32x16x16xf32, #tpu.memory_space<vmem>>, vector<1x16x16xf32>
    %334 = vector.shape_cast %333 : vector<1x16x16xf32> to vector<16x16xf32>
    %335 = vector.broadcast %332 : vector<16x1xf32> to vector<16x16xf32>
    %336 = arith.mulf %335, %334 : vector<16x16xf32>
    %337 = arith.addf %331, %336 : vector<16x16xf32>
    %338 = vector.extract_strided_slice %7 {offsets = [0, 49], sizes = [16, 1], strides = [1, 1]} : vector<16x192xf32> to vector<16x1xf32>
    %c17_134 = arith.constant 17 : index
    %c0_135 = arith.constant 0 : index
    %c0_136 = arith.constant 0 : index
    %339 = vector.load %arg6[%c17_134, %c0_135, %c0_136] : memref<32x16x16xf32, #tpu.memory_space<vmem>>, vector<1x16x16xf32>
    %340 = vector.shape_cast %339 : vector<1x16x16xf32> to vector<16x16xf32>
    %341 = vector.broadcast %338 : vector<16x1xf32> to vector<16x16xf32>
    %342 = arith.mulf %341, %340 : vector<16x16xf32>
    %343 = arith.addf %337, %342 : vector<16x16xf32>
    %344 = vector.extract_strided_slice %7 {offsets = [0, 50], sizes = [16, 1], strides = [1, 1]} : vector<16x192xf32> to vector<16x1xf32>
    %c18_137 = arith.constant 18 : index
    %c0_138 = arith.constant 0 : index
    %c0_139 = arith.constant 0 : index
    %345 = vector.load %arg6[%c18_137, %c0_138, %c0_139] : memref<32x16x16xf32, #tpu.memory_space<vmem>>, vector<1x16x16xf32>
    %346 = vector.shape_cast %345 : vector<1x16x16xf32> to vector<16x16xf32>
    %347 = vector.broadcast %344 : vector<16x1xf32> to vector<16x16xf32>
    %348 = arith.mulf %347, %346 : vector<16x16xf32>
    %349 = arith.addf %343, %348 : vector<16x16xf32>
    %350 = vector.extract_strided_slice %7 {offsets = [0, 51], sizes = [16, 1], strides = [1, 1]} : vector<16x192xf32> to vector<16x1xf32>
    %c19_140 = arith.constant 19 : index
    %c0_141 = arith.constant 0 : index
    %c0_142 = arith.constant 0 : index
    %351 = vector.load %arg6[%c19_140, %c0_141, %c0_142] : memref<32x16x16xf32, #tpu.memory_space<vmem>>, vector<1x16x16xf32>
    %352 = vector.shape_cast %351 : vector<1x16x16xf32> to vector<16x16xf32>
    %353 = vector.broadcast %350 : vector<16x1xf32> to vector<16x16xf32>
    %354 = arith.mulf %353, %352 : vector<16x16xf32>
    %355 = arith.addf %349, %354 : vector<16x16xf32>
    %356 = vector.extract_strided_slice %7 {offsets = [0, 52], sizes = [16, 1], strides = [1, 1]} : vector<16x192xf32> to vector<16x1xf32>
    %c20_143 = arith.constant 20 : index
    %c0_144 = arith.constant 0 : index
    %c0_145 = arith.constant 0 : index
    %357 = vector.load %arg6[%c20_143, %c0_144, %c0_145] : memref<32x16x16xf32, #tpu.memory_space<vmem>>, vector<1x16x16xf32>
    %358 = vector.shape_cast %357 : vector<1x16x16xf32> to vector<16x16xf32>
    %359 = vector.broadcast %356 : vector<16x1xf32> to vector<16x16xf32>
    %360 = arith.mulf %359, %358 : vector<16x16xf32>
    %361 = arith.addf %355, %360 : vector<16x16xf32>
    %362 = vector.extract_strided_slice %7 {offsets = [0, 53], sizes = [16, 1], strides = [1, 1]} : vector<16x192xf32> to vector<16x1xf32>
    %c21_146 = arith.constant 21 : index
    %c0_147 = arith.constant 0 : index
    %c0_148 = arith.constant 0 : index
    %363 = vector.load %arg6[%c21_146, %c0_147, %c0_148] : memref<32x16x16xf32, #tpu.memory_space<vmem>>, vector<1x16x16xf32>
    %364 = vector.shape_cast %363 : vector<1x16x16xf32> to vector<16x16xf32>
    %365 = vector.broadcast %362 : vector<16x1xf32> to vector<16x16xf32>
    %366 = arith.mulf %365, %364 : vector<16x16xf32>
    %367 = arith.addf %361, %366 : vector<16x16xf32>
    %368 = vector.extract_strided_slice %7 {offsets = [0, 54], sizes = [16, 1], strides = [1, 1]} : vector<16x192xf32> to vector<16x1xf32>
    %c22_149 = arith.constant 22 : index
    %c0_150 = arith.constant 0 : index
    %c0_151 = arith.constant 0 : index
    %369 = vector.load %arg6[%c22_149, %c0_150, %c0_151] : memref<32x16x16xf32, #tpu.memory_space<vmem>>, vector<1x16x16xf32>
    %370 = vector.shape_cast %369 : vector<1x16x16xf32> to vector<16x16xf32>
    %371 = vector.broadcast %368 : vector<16x1xf32> to vector<16x16xf32>
    %372 = arith.mulf %371, %370 : vector<16x16xf32>
    %373 = arith.addf %367, %372 : vector<16x16xf32>
    %374 = vector.extract_strided_slice %7 {offsets = [0, 55], sizes = [16, 1], strides = [1, 1]} : vector<16x192xf32> to vector<16x1xf32>
    %c23_152 = arith.constant 23 : index
    %c0_153 = arith.constant 0 : index
    %c0_154 = arith.constant 0 : index
    %375 = vector.load %arg6[%c23_152, %c0_153, %c0_154] : memref<32x16x16xf32, #tpu.memory_space<vmem>>, vector<1x16x16xf32>
    %376 = vector.shape_cast %375 : vector<1x16x16xf32> to vector<16x16xf32>
    %377 = vector.broadcast %374 : vector<16x1xf32> to vector<16x16xf32>
    %378 = arith.mulf %377, %376 : vector<16x16xf32>
    %379 = arith.addf %373, %378 : vector<16x16xf32>
    %380 = vector.extract_strided_slice %7 {offsets = [0, 56], sizes = [16, 1], strides = [1, 1]} : vector<16x192xf32> to vector<16x1xf32>
    %c24_155 = arith.constant 24 : index
    %c0_156 = arith.constant 0 : index
    %c0_157 = arith.constant 0 : index
    %381 = vector.load %arg6[%c24_155, %c0_156, %c0_157] : memref<32x16x16xf32, #tpu.memory_space<vmem>>, vector<1x16x16xf32>
    %382 = vector.shape_cast %381 : vector<1x16x16xf32> to vector<16x16xf32>
    %383 = vector.broadcast %380 : vector<16x1xf32> to vector<16x16xf32>
    %384 = arith.mulf %383, %382 : vector<16x16xf32>
    %385 = arith.addf %379, %384 : vector<16x16xf32>
    %386 = vector.extract_strided_slice %7 {offsets = [0, 57], sizes = [16, 1], strides = [1, 1]} : vector<16x192xf32> to vector<16x1xf32>
    %c25_158 = arith.constant 25 : index
    %c0_159 = arith.constant 0 : index
    %c0_160 = arith.constant 0 : index
    %387 = vector.load %arg6[%c25_158, %c0_159, %c0_160] : memref<32x16x16xf32, #tpu.memory_space<vmem>>, vector<1x16x16xf32>
    %388 = vector.shape_cast %387 : vector<1x16x16xf32> to vector<16x16xf32>
    %389 = vector.broadcast %386 : vector<16x1xf32> to vector<16x16xf32>
    %390 = arith.mulf %389, %388 : vector<16x16xf32>
    %391 = arith.addf %385, %390 : vector<16x16xf32>
    %392 = vector.extract_strided_slice %7 {offsets = [0, 58], sizes = [16, 1], strides = [1, 1]} : vector<16x192xf32> to vector<16x1xf32>
    %c26_161 = arith.constant 26 : index
    %c0_162 = arith.constant 0 : index
    %c0_163 = arith.constant 0 : index
    %393 = vector.load %arg6[%c26_161, %c0_162, %c0_163] : memref<32x16x16xf32, #tpu.memory_space<vmem>>, vector<1x16x16xf32>
    %394 = vector.shape_cast %393 : vector<1x16x16xf32> to vector<16x16xf32>
    %395 = vector.broadcast %392 : vector<16x1xf32> to vector<16x16xf32>
    %396 = arith.mulf %395, %394 : vector<16x16xf32>
    %397 = arith.addf %391, %396 : vector<16x16xf32>
    %398 = vector.extract_strided_slice %7 {offsets = [0, 59], sizes = [16, 1], strides = [1, 1]} : vector<16x192xf32> to vector<16x1xf32>
    %c27_164 = arith.constant 27 : index
    %c0_165 = arith.constant 0 : index
    %c0_166 = arith.constant 0 : index
    %399 = vector.load %arg6[%c27_164, %c0_165, %c0_166] : memref<32x16x16xf32, #tpu.memory_space<vmem>>, vector<1x16x16xf32>
    %400 = vector.shape_cast %399 : vector<1x16x16xf32> to vector<16x16xf32>
    %401 = vector.broadcast %398 : vector<16x1xf32> to vector<16x16xf32>
    %402 = arith.mulf %401, %400 : vector<16x16xf32>
    %403 = arith.addf %397, %402 : vector<16x16xf32>
    %404 = vector.extract_strided_slice %7 {offsets = [0, 60], sizes = [16, 1], strides = [1, 1]} : vector<16x192xf32> to vector<16x1xf32>
    %c28_167 = arith.constant 28 : index
    %c0_168 = arith.constant 0 : index
    %c0_169 = arith.constant 0 : index
    %405 = vector.load %arg6[%c28_167, %c0_168, %c0_169] : memref<32x16x16xf32, #tpu.memory_space<vmem>>, vector<1x16x16xf32>
    %406 = vector.shape_cast %405 : vector<1x16x16xf32> to vector<16x16xf32>
    %407 = vector.broadcast %404 : vector<16x1xf32> to vector<16x16xf32>
    %408 = arith.mulf %407, %406 : vector<16x16xf32>
    %409 = arith.addf %403, %408 : vector<16x16xf32>
    %410 = vector.extract_strided_slice %7 {offsets = [0, 61], sizes = [16, 1], strides = [1, 1]} : vector<16x192xf32> to vector<16x1xf32>
    %c29_170 = arith.constant 29 : index
    %c0_171 = arith.constant 0 : index
    %c0_172 = arith.constant 0 : index
    %411 = vector.load %arg6[%c29_170, %c0_171, %c0_172] : memref<32x16x16xf32, #tpu.memory_space<vmem>>, vector<1x16x16xf32>
    %412 = vector.shape_cast %411 : vector<1x16x16xf32> to vector<16x16xf32>
    %413 = vector.broadcast %410 : vector<16x1xf32> to vector<16x16xf32>
    %414 = arith.mulf %413, %412 : vector<16x16xf32>
    %415 = arith.addf %409, %414 : vector<16x16xf32>
    %416 = vector.extract_strided_slice %7 {offsets = [0, 62], sizes = [16, 1], strides = [1, 1]} : vector<16x192xf32> to vector<16x1xf32>
    %c30_173 = arith.constant 30 : index
    %c0_174 = arith.constant 0 : index
    %c0_175 = arith.constant 0 : index
    %417 = vector.load %arg6[%c30_173, %c0_174, %c0_175] : memref<32x16x16xf32, #tpu.memory_space<vmem>>, vector<1x16x16xf32>
    %418 = vector.shape_cast %417 : vector<1x16x16xf32> to vector<16x16xf32>
    %419 = vector.broadcast %416 : vector<16x1xf32> to vector<16x16xf32>
    %420 = arith.mulf %419, %418 : vector<16x16xf32>
    %421 = arith.addf %415, %420 : vector<16x16xf32>
    %422 = vector.extract_strided_slice %7 {offsets = [0, 63], sizes = [16, 1], strides = [1, 1]} : vector<16x192xf32> to vector<16x1xf32>
    %c31_176 = arith.constant 31 : index
    %c0_177 = arith.constant 0 : index
    %c0_178 = arith.constant 0 : index
    %423 = vector.load %arg6[%c31_176, %c0_177, %c0_178] : memref<32x16x16xf32, #tpu.memory_space<vmem>>, vector<1x16x16xf32>
    %424 = vector.shape_cast %423 : vector<1x16x16xf32> to vector<16x16xf32>
    %425 = vector.broadcast %422 : vector<16x1xf32> to vector<16x16xf32>
    %426 = arith.mulf %425, %424 : vector<16x16xf32>
    %427 = arith.addf %421, %426 : vector<16x16xf32>
    %428 = arith.addf %234, %427 : vector<16x16xf32>
    %cst_179 = arith.constant 0.176776692 : f32
    %429 = vector.broadcast %cst_179 : f32 to vector<16x16xf32>
    %430 = arith.mulf %428, %429 : vector<16x16xf32>
    %cst_180 = arith.constant dense<0xFF800000> : vector<16xf32>
    %431 = vector.multi_reduction <maximumf>, %430, %cst_180 [1] : vector<16x16xf32> to vector<16xf32>
    %432 = vector.shape_cast %431 : vector<16xf32> to vector<16x1xf32>
    %433 = vector.broadcast %432 : vector<16x1xf32> to vector<16x16xf32>
    %434 = arith.subf %430, %433 : vector<16x16xf32>
    %435 = math.exp %434 : vector<16x16xf32>
    %cst_181 = arith.constant dense<0.000000e+00> : vector<16xf32>
    %436 = vector.multi_reduction <add>, %435, %cst_181 [1] : vector<16x16xf32> to vector<16xf32>
    %437 = vector.shape_cast %436 : vector<16xf32> to vector<16x1xf32>
    %438 = tpu.reciprocal %437 {approx = true} : vector<16x1xf32> -> vector<16x1xf32>
    %439 = vector.broadcast %438 : vector<16x1xf32> to vector<16x16xf32>
    %440 = arith.mulf %435, %439 : vector<16x16xf32>
    %441 = arith.truncf %440 : vector<16x16xf32> to vector<16x16xbf16>
    %cst_182 = arith.constant dense<0.000000e+00> : vector<16x32xf32>
    %442 = tpu.matmul %441, %233, %cst_182 {dimension_numbers = #tpu.dot_dimension_numbers<[1], [0], [0], [1], [0, 0, 1, 1], [], []>} : vector<16x16xbf16>, vector<16x32xbf16>, vector<16x32xf32> -> vector<16x32xf32>
    %c32 = arith.constant 32 : index
    %c0_183 = arith.constant 0 : index
    %443 = vector.load %arg4[%c32, %c0_183] : memref<64x64xbf16, #tpu.memory_space<vmem>>, vector<32x64xbf16>
    %444 = arith.truncf %442 : vector<16x32xf32> to vector<16x32xbf16>
    %cst_184 = arith.constant dense<0.000000e+00> : vector<16x64xf32>
    %445 = tpu.matmul %444, %443, %cst_184 {dimension_numbers = #tpu.dot_dimension_numbers<[1], [0], [0], [1], [0, 0, 1, 1], [], []>} : vector<16x32xbf16>, vector<32x64xbf16>, vector<16x64xf32> -> vector<16x64xf32>
    %446 = arith.addf %227, %445 : vector<16x64xf32>
    %c0_185 = arith.constant 0 : index
    %c0_186 = arith.constant 0 : index
    %447 = vector.load %arg5[%c0_185, %c0_186] : memref<1x64xf32, #tpu.memory_space<vmem>>, vector<1x64xf32>
    %448 = vector.broadcast %447 : vector<1x64xf32> to vector<16x64xf32>
    %449 = arith.addf %446, %448 : vector<16x64xf32>
    %c0_187 = arith.constant 0 : index
    %c0_188 = arith.constant 0 : index
    %c0_189 = arith.constant 0 : index
    %450 = vector.load %arg7[%c0_187, %c0_188, %c0_189] : memref<1x16x64xf32, #tpu.memory_space<vmem>>, vector<1x16x64xf32>
    %451 = vector.shape_cast %450 : vector<1x16x64xf32> to vector<16x64xf32>
    %452 = vector.shape_cast %449 : vector<16x64xf32> to vector<1x16x64xf32>
    tpu.vector_store %arg7[%c0_187, %c0_188, %c0_189], %452 {strides = array<i32>} : memref<1x16x64xf32, #tpu.memory_space<vmem>>, vector<1x16x64xf32>,
    return
  }
  func.func @transform_0(%arg0: i32) -> (i32, i32, i32) {
    %c0_i32 = arith.constant 0 : i32
    %c0_i32_0 = arith.constant 0 : i32
    %c0_i32_1 = arith.constant 0 : i32
    return %arg0, %c0_i32, %c0_i32_0 : i32, i32, i32
  }
  func.func @transform_1(%arg0: i32) -> (i32, i32) {
    %c0_i32 = arith.constant 0 : i32
    %c0_i32_0 = arith.constant 0 : i32
    %c0_i32_1 = arith.constant 0 : i32
    return %c0_i32, %c0_i32_0 : i32, i32
  }
  func.func @transform_2(%arg0: i32) -> (i32, i32) {
    %c0_i32 = arith.constant 0 : i32
    %c0_i32_0 = arith.constant 0 : i32
    %c0_i32_1 = arith.constant 0 : i32
    return %c0_i32, %c0_i32_0 : i32, i32
  }
  func.func @transform_3(%arg0: i32) -> (i32, i32) {
    %c0_i32 = arith.constant 0 : i32
    %c0_i32_0 = arith.constant 0 : i32
    %c0_i32_1 = arith.constant 0 : i32
    return %c0_i32, %c0_i32_0 : i32, i32
  }
  func.func @transform_4(%arg0: i32) -> (i32, i32) {
    %c0_i32 = arith.constant 0 : i32
    %c0_i32_0 = arith.constant 0 : i32
    %c0_i32_1 = arith.constant 0 : i32
    return %c0_i32, %c0_i32_0 : i32, i32
  }
  func.func @transform_5(%arg0: i32) -> (i32, i32, i32) {
    %c0_i32 = arith.constant 0 : i32
    %c0_i32_0 = arith.constant 0 : i32
    %c0_i32_1 = arith.constant 0 : i32
    %c0_i32_2 = arith.constant 0 : i32
    return %c0_i32, %c0_i32_0, %c0_i32_1 : i32, i32, i32
  }
  func.func @transform_6(%arg0: i32) -> (i32, i32, i32) {
    %c0_i32 = arith.constant 0 : i32
    %c0_i32_0 = arith.constant 0 : i32
    %c0_i32_1 = arith.constant 0 : i32
    return %arg0, %c0_i32, %c0_i32_0 : i32, i32, i32
  }
}

</mosaic_0001>

<llo_original>
// kernel: tpu_custom_call.1
$region0: #{tpu_custom_call.1}
  #allocation0 [shape = 'u32[]', space=smem, size = 0x4, offset = 0x4, fixed_abs, tag = 'smem constant byte address 0x4 - core index']
  #allocation1 [shape = 'u32[144,128]{1,0:T(1,128)}', space=vmem, size = 0x12000, scoped, tag = 'internal scratch']
  %s0 = inlined_call_operand.vmem [shape: f32[2,16,64], index: 0, kind: input, shape index: {}]
  %s1 = inlined_call_operand.vmem [shape: bf16[64,192], index: 1, kind: input, shape index: {}]
  %s2 = inlined_call_operand.vmem [shape: f32[1,192], index: 2, kind: input, shape index: {}]
  %s3 = inlined_call_operand.vmem [shape: bf16[64,64], index: 3, kind: input, shape index: {}]
  %s4 = inlined_call_operand.vmem [shape: f32[1,64], index: 4, kind: input, shape index: {}]
  %s5 = inlined_call_operand.vmem [shape: f32[32,16,16], index: 5, kind: input, shape index: {}]
  %s6 = inlined_call_operand.hbm [shape: f32[2,16,64], index: 6, kind: output, shape index: {}]
  %s7 = sld [smem:[#allocation0]]
  $region57: #{tpu_custom_call.1} parent=0
    _
  %s9 = ssub.s32 1, %s7
  %s10 = scalar_select 0, %s9, %s7
  $region1: #{tpu_custom_call.1} parent=0
    #allocation2 [shape = 'u8[16384]{0}', space=vmem, size = 0x4000, scoped, tag = 'output window, operand 0']
    #allocation3 [shape = 's32[2]{0}', space=sflag, size = 0x8, scoped, tag = 'scoped memory for tpu_custom_call.1']
    %11 = vsyncpa [#allocation3], 0
    %s12 = scalar_lea.sflag [#allocation3], 1
    %13 = vsyncpa %s12, 0
    loop: start=0, step=1, limit=4
    $region2: #{tpu_custom_call.1} parent=1 // loop_pre_header
      _
    $region3: #{tpu_custom_call.1} parent=1 // loop_header
      %s15 = sphi 0, %s19
      %p16 = scmp.ge.s32.totalorder %s15, 4
      %s25 = sphi 0, %s27
      %s28 = sphi 0, %s25
      %s29 = sphi 0, %s28
      %s45 = sphi 0, %s29
      %s49 = sphi 0, %s49
      %s51 = sphi 0, %s49
      %s52 = sphi 0, %s51
      %s66 = sphi 0, %s52
      %s70 = sphi 0, %s70
      %s72 = sphi 0, %s70
      %s73 = sphi 0, %s72
      %s87 = sphi 0, %s73
      %s91 = sphi 0, %s91
      %s93 = sphi 0, %s91
      %s94 = sphi 0, %s93
      %s108 = sphi 0, %s94
      %s112 = sphi 0, %s112
      %s114 = sphi 0, %s112
      %s115 = sphi 0, %s114
      %s129 = sphi 0, %s115
      %s133 = sphi 0, %s133
      %s135 = sphi 0, %s133
      %s136 = sphi 0, %s135
      %s150 = sphi 0, %s136
      %s156 = sphi 0, %s158
      %s159 = sphi 0, %s156
      %s160 = sphi 0, %s159
      %s176 = sphi 0, %s160
    $region4: #{tpu_custom_call.1} parent=1 // loop_header_branch
      %18 = sbr.rel (%p16) target = $region8
    $region5: #{tpu_custom_call.1} parent=1 // loop_body
      %s20 = ssub.s32 %s15, 1
      %s21 = ssub.s32 %s15, 2
      %s22 = sadd.s32 %s15, 1
      %s23 = ssub.s32 %s15, %s22
      %p24 = scmp.eq.s32.totalorder %s23, 0
      %s26 = sadd.s32 %s25, 1
      %s27 = scalar_select %p24, %s25, %s26
      %p30 = pneg %p24
      %p31 = scmp.eq.s32.totalorder %s15, 1
      %p32 = por %p30, %p31
      %p33 = scmp.ne.s32.totalorder %s25, %s28
      %p34 = scmp.eq.s32.totalorder %s15, 0
      %p35 = por %p33, %p34
      %p36 = scmp.ne.s32.totalorder %s25, %s28
      %p37 = scmp.eq.s32.totalorder %s20, 1
      %p38 = por %p36, %p37
      %p39 = scmp.ne.s32.totalorder %s28, %s29
      %p40 = scmp.eq.s32.totalorder %s20, 0
      %p41 = por %p39, %p40
      %p42 = scmp.ne.s32.totalorder %s28, %s29
      %p43 = scmp.eq.s32.totalorder %s21, 1
      %p44 = por %p42, %p43
      %p46 = scmp.ne.s32.totalorder %s29, %s45
      %p47 = scmp.eq.s32.totalorder %s21, 0
      %p48 = por %p46, %p47
      %s50 = sadd.s32 %s49, 1
      %p53 = scmp.eq.s32.totalorder %s15, 1
      %p54 = scmp.ne.s32.totalorder %s49, %s51
      %p55 = scmp.eq.s32.totalorder %s15, 0
      %p56 = por %p54, %p55
      %p57 = scmp.ne.s32.totalorder %s49, %s51
      %p58 = scmp.eq.s32.totalorder %s20, 1
      %p59 = por %p57, %p58
      %p60 = scmp.ne.s32.totalorder %s51, %s52
      %p61 = scmp.eq.s32.totalorder %s20, 0
      %p62 = por %p60, %p61
      %p63 = scmp.ne.s32.totalorder %s51, %s52
      %p64 = scmp.eq.s32.totalorder %s21, 1
      %p65 = por %p63, %p64
      %p67 = scmp.ne.s32.totalorder %s52, %s66
      %p68 = scmp.eq.s32.totalorder %s21, 0
      %p69 = por %p67, %p68
      %s71 = sadd.s32 %s70, 1
      %p74 = scmp.eq.s32.totalorder %s15, 1
      %p75 = scmp.ne.s32.totalorder %s70, %s72
      %p76 = scmp.eq.s32.totalorder %s15, 0
      %p77 = por %p75, %p76
      %p78 = scmp.ne.s32.totalorder %s70, %s72
      %p79 = scmp.eq.s32.totalorder %s20, 1
      %p80 = por %p78, %p79
      %p81 = scmp.ne.s32.totalorder %s72, %s73
      %p82 = scmp.eq.s32.totalorder %s20, 0
      %p83 = por %p81, %p82
      %p84 = scmp.ne.s32.totalorder %s72, %s73
      %p85 = scmp.eq.s32.totalorder %s21, 1
      %p86 = por %p84, %p85
      %p88 = scmp.ne.s32.totalorder %s73, %s87
      %p89 = scmp.eq.s32.totalorder %s21, 0
      %p90 = por %p88, %p89
      %s92 = sadd.s32 %s91, 1
      %p95 = scmp.eq.s32.totalorder %s15, 1
      %p96 = scmp.ne.s32.totalorder %s91, %s93
      %p97 = scmp.eq.s32.totalorder %s15, 0
      %p98 = por %p96, %p97
      %p99 = scmp.ne.s32.totalorder %s91, %s93
      %p100 = scmp.eq.s32.totalorder %s20, 1
      %p101 = por %p99, %p100
      %p102 = scmp.ne.s32.totalorder %s93, %s94
      %p103 = scmp.eq.s32.totalorder %s20, 0
      %p104 = por %p102, %p103
      %p105 = scmp.ne.s32.totalorder %s93, %s94
      %p106 = scmp.eq.s32.totalorder %s21, 1
      %p107 = por %p105, %p106
      %p109 = scmp.ne.s32.totalorder %s94, %s108
      %p110 = scmp.eq.s32.totalorder %s21, 0
      %p111 = por %p109, %p110
      %s113 = sadd.s32 %s112, 1
      %p116 = scmp.eq.s32.totalorder %s15, 1
      %p117 = scmp.ne.s32.totalorder %s112, %s114
      %p118 = scmp.eq.s32.totalorder %s15, 0
      %p119 = por %p117, %p118
      %p120 = scmp.ne.s32.totalorder %s112, %s114
      %p121 = scmp.eq.s32.totalorder %s20, 1
      %p122 = por %p120, %p121
      %p123 = scmp.ne.s32.totalorder %s114, %s115
      %p124 = scmp.eq.s32.totalorder %s20, 0
      %p125 = por %p123, %p124
      %p126 = scmp.ne.s32.totalorder %s114, %s115
      %p127 = scmp.eq.s32.totalorder %s21, 1
      %p128 = por %p126, %p127
      %p130 = scmp.ne.s32.totalorder %s115, %s129
      %p131 = scmp.eq.s32.totalorder %s21, 0
      %p132 = por %p130, %p131
      %s134 = sadd.s32 %s133, 1
      %p137 = scmp.eq.s32.totalorder %s15, 1
      %p138 = scmp.ne.s32.totalorder %s133, %s135
      %p139 = scmp.eq.s32.totalorder %s15, 0
      %p140 = por %p138, %p139
      %p141 = scmp.ne.s32.totalorder %s133, %s135
      %p142 = scmp.eq.s32.totalorder %s20, 1
      %p143 = por %p141, %p142
      %p144 = scmp.ne.s32.totalorder %s135, %s136
      %p145 = scmp.eq.s32.totalorder %s20, 0
      %p146 = por %p144, %p145
      %p147 = scmp.ne.s32.totalorder %s135, %s136
      %p148 = scmp.eq.s32.totalorder %s21, 1
      %p149 = por %p147, %p148
      %p151 = scmp.ne.s32.totalorder %s136, %s150
      %p152 = scmp.eq.s32.totalorder %s21, 0
      %p153 = por %p151, %p152
      %s154 = ssub.s32 %s15, %s22
      %p155 = scmp.eq.s32.totalorder %s154, 0
      %s157 = sadd.s32 %s156, 1
      %s158 = scalar_select %p155, %s156, %s157
      %p161 = pneg %p155
      %p162 = scmp.eq.s32.totalorder %s15, 1
      %p163 = por %p161, %p162
      %p164 = scmp.ne.s32.totalorder %s156, %s159
      %p165 = scmp.eq.s32.totalorder %s15, 0
      %p166 = por %p164, %p165
      %p167 = scmp.ne.s32.totalorder %s156, %s159
      %p168 = scmp.eq.s32.totalorder %s20, 1
      %p169 = por %p167, %p168
      %p170 = scmp.ne.s32.totalorder %s159, %s160
      %p171 = scmp.eq.s32.totalorder %s20, 0
      %p172 = por %p170, %p171
      %p173 = scmp.ne.s32.totalorder %s159, %s160
      %p174 = scmp.eq.s32.totalorder %s21, 1
      %p175 = por %p173, %p174
      %p177 = scmp.ne.s32.totalorder %s160, %s176
      %p178 = scmp.eq.s32.totalorder %s21, 0
      %p179 = por %p177, %p178
      %p180 = scmp.le.s32.totalorder 1, %s15
      %p181 = scmp.lt.s32.totalorder %s15, 3
      %p182 = pnand %p180, %p181
      %p183 = pneg %p182
      // Predicated region
      $region9: #{tpu_custom_call.1} parent=5 // pred_check
        _
      $region10: #{tpu_custom_call.1} parent=5 // pred_check_branch
        %185 = sbr.rel (%p182) target = $region12
      $region11: #{tpu_custom_call.1} parent=5 // pred_region
        %s186 = ssub.s32 %s15, 1
        // Predicated region
        $region13: #{tpu_custom_call.1} parent=11 // pred_check
          %p187 = pneg %p62
        $region14: #{tpu_custom_call.1} parent=11 // pred_check_branch
          %189 = sbr.rel (%p187) target = $region16
        $region15: #{tpu_custom_call.1} parent=11 // pred_region
          _
        $region16: #{tpu_custom_call.1} parent=11 // pred_fallthru
          _
        // Predicated region
        $region17: #{tpu_custom_call.1} parent=11 // pred_check
          %p190 = pneg %p83
        $region18: #{tpu_custom_call.1} parent=11 // pred_check_branch
          %192 = sbr.rel (%p190) target = $region20
        $region19: #{tpu_custom_call.1} parent=11 // pred_region
          _
        $region20: #{tpu_custom_call.1} parent=11 // pred_fallthru
          _
        // Predicated region
        $region21: #{tpu_custom_call.1} parent=11 // pred_check
          %p193 = pneg %p104
        $region22: #{tpu_custom_call.1} parent=11 // pred_check_branch
          %195 = sbr.rel (%p193) target = $region24
        $region23: #{tpu_custom_call.1} parent=11 // pred_region
          _
        $region24: #{tpu_custom_call.1} parent=11 // pred_fallthru
          _
        // Predicated region
        $region25: #{tpu_custom_call.1} parent=11 // pred_check
          %p196 = pneg %p125
        $region26: #{tpu_custom_call.1} parent=11 // pred_check_branch
          %198 = sbr.rel (%p196) target = $region28
        $region27: #{tpu_custom_call.1} parent=11 // pred_region
          _
        $region28: #{tpu_custom_call.1} parent=11 // pred_fallthru
          _
        // Predicated region
        $region29: #{tpu_custom_call.1} parent=11 // pred_check
          %p199 = pneg %p146
        $region30: #{tpu_custom_call.1} parent=11 // pred_check_branch
          %201 = sbr.rel (%p199) target = $region32
        $region31: #{tpu_custom_call.1} parent=11 // pred_region
          _
        $region32: #{tpu_custom_call.1} parent=11 // pred_fallthru
          _
      $region12: #{tpu_custom_call.1} parent=5 // pred_fallthru
        _
      %p202 = scmp.lt.s32.totalorder %s15, 2
      // Predicated region
      $region33: #{tpu_custom_call.1} parent=5 // pred_check
        %p203 = pneg %p202
      $region34: #{tpu_custom_call.1} parent=5 // pred_check_branch
        %205 = sbr.rel (%p203) target = $region36
      $region35: #{tpu_custom_call.1} parent=5 // pred_region
        // Predicated region
        $region37: #{tpu_custom_call.1} parent=35 // pred_check
          %p206 = pneg %p35
        $region38: #{tpu_custom_call.1} parent=35 // pred_check_branch
          %208 = sbr.rel (%p206) target = $region40
        $region39: #{tpu_custom_call.1} parent=35 // pred_region
          %p209 = scmp.lt.s32.totalorder %s15, 1
          %s210 = scalar_select %p209, %s15, 1
          %s211 = smul.addr %s210, 2
          %s212 = smul.addr %s211, 8
          %s213 = scalar_lea.vmem %s0, %s212
        $region40: #{tpu_custom_call.1} parent=35 // pred_fallthru
          _
      $region36: #{tpu_custom_call.1} parent=5 // pred_fallthru
        _
      %p214 = scmp.le.s32.totalorder 1, %s15
      %p215 = scmp.lt.s32.totalorder %s15, 3
      %p216 = pnand %p214, %p215
      %p217 = pneg %p216
      // Predicated region
      $region41: #{tpu_custom_call.1} parent=5 // pred_check
        _
      $region42: #{tpu_custom_call.1} parent=5 // pred_check_branch
        %219 = sbr.rel (%p216) target = $region44
      $region43: #{tpu_custom_call.1} parent=5 // pred_region
        %s220 = ssub.s32 %s15, 1
        %p221 = scmp.lt.s32.totalorder %s20, 1
        %s222 = scalar_select %p221, %s20, 1
        %s223 = smul.addr %s222, 2
        %s224 = smul.addr %s223, 8
        %s225 = scalar_lea.vmem %s0, %s224
        %p226 = pneg %p41
        %p227 = pneg %p38
        %p228 = pneg %p62
        %p229 = pneg %p59
        %p230 = pneg %p83
        %p231 = pneg %p80
        %p232 = pneg %p104
        %p233 = pneg %p101
        %p234 = pneg %p125
        %p235 = pneg %p122
        %p236 = pneg %p146
        %p237 = pneg %p143
        %p238 = pneg %p172
        %p239 = pneg %p169
        %s240 = sand.u32 %s159, 1
        %s241 = scalar_lea.sflag [#allocation3], %s240
        %s242 = sand.u32 %s159, 1
        %s243 = smul.addr %s242, 16
        %s244 = scalar_lea.vmem [#allocation2], %s243
        %p245 = scmp.lt.s32.totalorder %s20, 1
        %s246 = scalar_select %p245, %s20, 1
        %s247 = smul.addr %s246, 2
        %s248 = smul.addr %s247, 8
        %s249 = scalar_lea.vmem %s0, %s248
        %v251 = vld [vmem:[%s249] sm:$0xff]
        %v252 = vld [vmem:[%s249 + $0x8] sm:$0xff]
        %v253 = vpack.c.bf16 %v252, %v251
        %v254 = vld [vmem:[%s1] sm:$0xff]
        %v255 = vld [vmem:[%s1 + $0x8] sm:$0xff]
        %v256 = vld [vmem:[%s1 + $0x10] sm:$0xff]
        %v257 = vld [vmem:[%s1 + $0x18] sm:$0xff]
        %v258 = vld [vmem:[%s1 + $0x20] sm:$0xff]
        %v259 = vld [vmem:[%s1 + $0x28] sm:$0xff]
        %v260 = vld [vmem:[%s1 + $0x30] sm:$0xff]
        %v261 = vld [vmem:[%s1 + $0x38] sm:$0xff]
        %v262 = vld [vmem:[%s2] sm:$0x3]
        %v264 = vlaneseq
        %v265 = vshrl.u32 %v264, 7
        %v266 = vsub.s32 0, %v265
        %v267 = vrot.slane %v262, %v266
        %v268 = vlaneseq
        %v269 = vshrl.u32 %v268, 7
        %v270 = vsub.s32 1, %v269
        %v271 = vrot.slane %v262, %v270
        %v282 = vunpack.c.l.b16 %v254
        %v283 = vunpack.c.h.b16 %v254
        %v284 = vunpack.c.l.b16 %v255
        %v285 = vunpack.c.h.b16 %v255
        %v286 = vunpack.c.l.b16 %v256
        %v287 = vunpack.c.h.b16 %v256
        %v288 = vunpack.c.l.b16 %v257
        %v289 = vunpack.c.h.b16 %v257
        %v290 = vunpack.c.l.b16 %v258
        %v291 = vunpack.c.h.b16 %v258
        %v292 = vunpack.c.l.b16 %v259
        %v293 = vunpack.c.h.b16 %v259
        %v294 = vunpack.c.l.b16 %v260
        %v295 = vunpack.c.h.b16 %v260
        %v296 = vunpack.c.l.b16 %v261
        %v297 = vunpack.c.h.b16 %v261
        %v298 = vpack.c.b16 %v284, %v282
        %v299 = vpack.c.b16 %v285, %v283
        %v300 = vpack.c.b16 %v288, %v286
        %v301 = vpack.c.b16 %v289, %v287
        %v302 = vpack.c.b16 %v292, %v290
        %v303 = vpack.c.b16 %v293, %v291
        %v304 = vpack.c.b16 %v296, %v294
        %v305 = vpack.c.b16 %v297, %v295
        %vm314 = vcmask 523264
        %v316 = vsel %vm314, %v253, 0
        %318 = vmatprep.subr.bf16.mxu0 0
        %319 = vmatpush1.bf16.msra.mxu0 0
        %320 = vmatprep.subr.bf16.mxu0 0
        %321 = vmatpush1.bf16.msra.mxu0 0
        %322 = vmatprep.subr.bf16.mxu0 0
        %323 = vmatpush1.bf16.msra.mxu0 0
        %324 = vmatprep.subr.bf16.mxu0 0
        %325 = vmatpush1.bf16.msra.mxu0 0
        %326 = vmatprep.subr.bf16.mxu0 %v305
        %327 = vmatpush1.bf16.msra.mxu0 %v304
        %328 = vmatprep.subr.bf16.mxu0 %v303
        %329 = vmatpush1.bf16.msra.mxu0 %v302
        %330 = vmatprep.subr.bf16.mxu0 %v301
        %331 = vmatpush1.bf16.msra.mxu0 %v300
        %332 = vmatprep.subr.bf16.mxu0 %v299
        %333 = vmatpush1.bf16.msra.mxu0 %v298
        %334 = vmatprep.subr.bf16.mxu0 0
        %335 = vmatpush2.bf16.msra.mxu0 0
        %336 = vmatprep.subr.bf16.mxu0 0
        %337 = vmatpush2.bf16.msra.mxu0 0
        %338 = vmatprep.subr.bf16.mxu0 0
        %339 = vmatpush2.bf16.msra.mxu0 0
        %340 = vmatprep.subr.bf16.mxu0 0
        %341 = vmatpush2.bf16.msra.mxu0 0
        %342 = vmatprep.subr.bf16.mxu0 0
        %343 = vmatpush2.bf16.msra.mxu0 0
        %344 = vmatprep.subr.bf16.mxu0 0
        %345 = vmatpush2.bf16.msra.mxu0 0
        %346 = vmatprep.subr.bf16.mxu0 0
        %347 = vmatpush2.bf16.msra.mxu0 0
        %348 = vmatprep.subr.bf16.mxu0 0
        %349 = vmatpush2.bf16.msra.mxu0 0
        %350 = vmatprep.mubr.bf16.mxu0 0
        %351 = vmatmul.mubr.bf16.gmra.mxu0 %v316
        %v352 = vpop.f32.mrf.mxu0
        %v353 = vadd.f32 %v267, %v352
        %v354 = vpop.f32.mrf.mxu0
        %v355 = vadd.f32 %v271, %v354
        %v356 = vpop.f32.mrf.mxu0
        %v357 = vadd.f32 %v267, %v356
        %v358 = vpop.f32.mrf.mxu0
        %v359 = vadd.f32 %v271, %v358
        %360 = vdwg.mxu0
        %v361 = vpack.c.bf16 %v357, %v353
        %v362 = vpack.c.bf16 %v359, %v355
        %v363 = vld [vmem:[%s5] sm:$0xff]
        %v364 = vld [vmem:[%s5 + $0x8] sm:$0xff]
        %366 = vset.pattern.permute.xlu0 0
        %367 = vperm.xlu0 %366, %v353
        %v368 = vpop.permute.xlu0 %367
        %371 = vset.pattern.permute.xlu0 0
        %372 = vperm.xlu0 %371, %v357
        %v373 = vpop.permute.xlu0 %372
        %v375 = vmul.f32 %v368, %v363
        %v376 = vmul.f32 %v373, %v364
        %v377 = vadd.f32 %v375, 0.0
        %v378 = vadd.f32 %v376, 0.0
        %s379 = scalar_lea.vmem %s5, 16
        %v380 = vld [vmem:[%s379] sm:$0xff]
        %v381 = vld [vmem:[%s379 + $0x8] sm:$0xff]
        %382 = vset.pattern.permute.xlu0 1
        %383 = vperm.xlu0 %382, %v353
        %v384 = vpop.permute.xlu0 %383
        %386 = vset.pattern.permute.xlu0 1
        %387 = vperm.xlu0 %386, %v357
        %v388 = vpop.permute.xlu0 %387
        %v390 = vmul.f32 %v384, %v380
        %v391 = vmul.f32 %v388, %v381
        %v392 = vadd.f32 %v377, %v390
        %v393 = vadd.f32 %v378, %v391
        %s394 = scalar_lea.vmem %s5, 32
        %v395 = vld [vmem:[%s394] sm:$0xff]
        %v396 = vld [vmem:[%s394 + $0x8] sm:$0xff]
        %397 = vset.pattern.permute.xlu0 2
        %398 = vperm.xlu0 %397, %v353
        %v399 = vpop.permute.xlu0 %398
        %401 = vset.pattern.permute.xlu0 2
        %402 = vperm.xlu0 %401, %v357
        %v403 = vpop.permute.xlu0 %402
        %v405 = vmul.f32 %v399, %v395
        %v406 = vmul.f32 %v403, %v396
        %v407 = vadd.f32 %v392, %v405
        %v408 = vadd.f32 %v393, %v406
        %s409 = scalar_lea.vmem %s5, 48
        %v410 = vld [vmem:[%s409] sm:$0xff]
        %v411 = vld [vmem:[%s409 + $0x8] sm:$0xff]
        %412 = vset.pattern.permute.xlu0 3
        %413 = vperm.xlu0 %412, %v353
        %v414 = vpop.permute.xlu0 %413
        %416 = vset.pattern.permute.xlu0 3
        %417 = vperm.xlu0 %416, %v357
        %v418 = vpop.permute.xlu0 %417
        %v420 = vmul.f32 %v414, %v410
        %v421 = vmul.f32 %v418, %v411
        %v422 = vadd.f32 %v407, %v420
        %v423 = vadd.f32 %v408, %v421
        %s424 = scalar_lea.vmem %s5, 64
        %v425 = vld [vmem:[%s424] sm:$0xff]
        %v426 = vld [vmem:[%s424 + $0x8] sm:$0xff]
        %427 = vset.pattern.permute.xlu0 4
        %428 = vperm.xlu0 %427, %v353
        %v429 = vpop.permute.xlu0 %428
        %431 = vset.pattern.permute.xlu0 4
        %432 = vperm.xlu0 %431, %v357
        %v433 = vpop.permute.xlu0 %432
        %v435 = vmul.f32 %v429, %v425
        %v436 = vmul.f32 %v433, %v426
        %v437 = vadd.f32 %v422, %v435
        %v438 = vadd.f32 %v423, %v436
        %s439 = scalar_lea.vmem %s5, 80
        %v440 = vld [vmem:[%s439] sm:$0xff]
        %v441 = vld [vmem:[%s439 + $0x8] sm:$0xff]
        %442 = vset.pattern.permute.xlu0 5
        %443 = vperm.xlu0 %442, %v353
        %v444 = vpop.permute.xlu0 %443
        %446 = vset.pattern.permute.xlu0 5
        %447 = vperm.xlu0 %446, %v357
        %v448 = vpop.permute.xlu0 %447
        %v450 = vmul.f32 %v444, %v440
        %v451 = vmul.f32 %v448, %v441
        %v452 = vadd.f32 %v437, %v450
        %v453 = vadd.f32 %v438, %v451
        %s454 = scalar_lea.vmem %s5, 96
        %v455 = vld [vmem:[%s454] sm:$0xff]
        %v456 = vld [vmem:[%s454 + $0x8] sm:$0xff]
        %457 = vset.pattern.permute.xlu0 6
        %458 = vperm.xlu0 %457, %v353
        %v459 = vpop.permute.xlu0 %458
        %461 = vset.pattern.permute.xlu0 6
        %462 = vperm.xlu0 %461, %v357
        %v463 = vpop.permute.xlu0 %462
        %v465 = vmul.f32 %v459, %v455
        %v466 = vmul.f32 %v463, %v456
        %v467 = vadd.f32 %v452, %v465
        %v468 = vadd.f32 %v453, %v466
        %s469 = scalar_lea.vmem %s5, 112
        %v470 = vld [vmem:[%s469] sm:$0xff]
        %v471 = vld [vmem:[%s469 + $0x8] sm:$0xff]
        %472 = vset.pattern.permute.xlu0 7
        %473 = vperm.xlu0 %472, %v353
        %v474 = vpop.permute.xlu0 %473
        %476 = vset.pattern.permute.xlu0 7
        %477 = vperm.xlu0 %476, %v357
        %v478 = vpop.permute.xlu0 %477
        %v480 = vmul.f32 %v474, %v470
        %v481 = vmul.f32 %v478, %v471
        %v482 = vadd.f32 %v467, %v480
        %v483 = vadd.f32 %v468, %v481
        %s484 = scalar_lea.vmem %s5, 128
        %v485 = vld [vmem:[%s484] sm:$0xff]
        %v486 = vld [vmem:[%s484 + $0x8] sm:$0xff]
        %487 = vset.pattern.permute.xlu0 8
        %488 = vperm.xlu0 %487, %v353
        %v489 = vpop.permute.xlu0 %488
        %491 = vset.pattern.permute.xlu0 8
        %492 = vperm.xlu0 %491, %v357
        %v493 = vpop.permute.xlu0 %492
        %v495 = vmul.f32 %v489, %v485
        %v496 = vmul.f32 %v493, %v486
        %v497 = vadd.f32 %v482, %v495
        %v498 = vadd.f32 %v483, %v496
        %s499 = scalar_lea.vmem %s5, 144
        %v500 = vld [vmem:[%s499] sm:$0xff]
        %v501 = vld [vmem:[%s499 + $0x8] sm:$0xff]
        %502 = vset.pattern.permute.xlu0 9
        %503 = vperm.xlu0 %502, %v353
        %v504 = vpop.permute.xlu0 %503
        %506 = vset.pattern.permute.xlu0 9
        %507 = vperm.xlu0 %506, %v357
        %v508 = vpop.permute.xlu0 %507
        %v510 = vmul.f32 %v504, %v500
        %v511 = vmul.f32 %v508, %v501
        %v512 = vadd.f32 %v497, %v510
        %v513 = vadd.f32 %v498, %v511
        %s514 = scalar_lea.vmem %s5, 160
        %v515 = vld [vmem:[%s514] sm:$0xff]
        %v516 = vld [vmem:[%s514 + $0x8] sm:$0xff]
        %517 = vset.pattern.permute.xlu0 10
        %518 = vperm.xlu0 %517, %v353
        %v519 = vpop.permute.xlu0 %518
        %521 = vset.pattern.permute.xlu0 10
        %522 = vperm.xlu0 %521, %v357
        %v523 = vpop.permute.xlu0 %522
        %v525 = vmul.f32 %v519, %v515
        %v526 = vmul.f32 %v523, %v516
        %v527 = vadd.f32 %v512, %v525
        %v528 = vadd.f32 %v513, %v526
        %s529 = scalar_lea.vmem %s5, 176
        %v530 = vld [vmem:[%s529] sm:$0xff]
        %v531 = vld [vmem:[%s529 + $0x8] sm:$0xff]
        %532 = vset.pattern.permute.xlu0 11
        %533 = vperm.xlu0 %532, %v353
        %v534 = vpop.permute.xlu0 %533
        %536 = vset.pattern.permute.xlu0 11
        %537 = vperm.xlu0 %536, %v357
        %v538 = vpop.permute.xlu0 %537
        %v540 = vmul.f32 %v534, %v530
        %v541 = vmul.f32 %v538, %v531
        %v542 = vadd.f32 %v527, %v540
        %v543 = vadd.f32 %v528, %v541
        %s544 = scalar_lea.vmem %s5, 192
        %v545 = vld [vmem:[%s544] sm:$0xff]
        %v546 = vld [vmem:[%s544 + $0x8] sm:$0xff]
        %547 = vset.pattern.permute.xlu0 12
        %548 = vperm.xlu0 %547, %v353
        %v549 = vpop.permute.xlu0 %548
        %551 = vset.pattern.permute.xlu0 12
        %552 = vperm.xlu0 %551, %v357
        %v553 = vpop.permute.xlu0 %552
        %v555 = vmul.f32 %v549, %v545
        %v556 = vmul.f32 %v553, %v546
        %v557 = vadd.f32 %v542, %v555
        %v558 = vadd.f32 %v543, %v556
        %s559 = scalar_lea.vmem %s5, 208
        %v560 = vld [vmem:[%s559] sm:$0xff]
        %v561 = vld [vmem:[%s559 + $0x8] sm:$0xff]
        %562 = vset.pattern.permute.xlu0 13
        %563 = vperm.xlu0 %562, %v353
        %v564 = vpop.permute.xlu0 %563
        %566 = vset.pattern.permute.xlu0 13
        %567 = vperm.xlu0 %566, %v357
        %v568 = vpop.permute.xlu0 %567
        %v570 = vmul.f32 %v564, %v560
        %v571 = vmul.f32 %v568, %v561
        %v572 = vadd.f32 %v557, %v570
        %v573 = vadd.f32 %v558, %v571
        %s574 = scalar_lea.vmem %s5, 224
        %v575 = vld [vmem:[%s574] sm:$0xff]
        %v576 = vld [vmem:[%s574 + $0x8] sm:$0xff]
        %577 = vset.pattern.permute.xlu0 14
        %578 = vperm.xlu0 %577, %v353
        %v579 = vpop.permute.xlu0 %578
        %581 = vset.pattern.permute.xlu0 14
        %582 = vperm.xlu0 %581, %v357
        %v583 = vpop.permute.xlu0 %582
        %v585 = vmul.f32 %v579, %v575
        %v586 = vmul.f32 %v583, %v576
        %v587 = vadd.f32 %v572, %v585
        %v588 = vadd.f32 %v573, %v586
        %s589 = scalar_lea.vmem %s5, 240
        %v590 = vld [vmem:[%s589] sm:$0xff]
        %v591 = vld [vmem:[%s589 + $0x8] sm:$0xff]
        %592 = vset.pattern.permute.xlu0 15
        %593 = vperm.xlu0 %592, %v353
        %v594 = vpop.permute.xlu0 %593
        %596 = vset.pattern.permute.xlu0 15
        %597 = vperm.xlu0 %596, %v357
        %v598 = vpop.permute.xlu0 %597
        %v600 = vmul.f32 %v594, %v590
        %v601 = vmul.f32 %v598, %v591
        %v602 = vadd.f32 %v587, %v600
        %v603 = vadd.f32 %v588, %v601
        %s604 = scalar_lea.vmem %s5, 256
        %v605 = vld [vmem:[%s604] sm:$0xff]
        %v606 = vld [vmem:[%s604 + $0x8] sm:$0xff]
        %607 = vset.pattern.permute.xlu0 16
        %608 = vperm.xlu0 %607, %v353
        %v609 = vpop.permute.xlu0 %608
        %611 = vset.pattern.permute.xlu0 16
        %612 = vperm.xlu0 %611, %v357
        %v613 = vpop.permute.xlu0 %612
        %v615 = vmul.f32 %v609, %v605
        %v616 = vmul.f32 %v613, %v606
        %v617 = vadd.f32 %v602, %v615
        %v618 = vadd.f32 %v603, %v616
        %s619 = scalar_lea.vmem %s5, 272
        %v620 = vld [vmem:[%s619] sm:$0xff]
        %v621 = vld [vmem:[%s619 + $0x8] sm:$0xff]
        %622 = vset.pattern.permute.xlu0 17
        %623 = vperm.xlu0 %622, %v353
        %v624 = vpop.permute.xlu0 %623
        %626 = vset.pattern.permute.xlu0 17
        %627 = vperm.xlu0 %626, %v357
        %v628 = vpop.permute.xlu0 %627
        %v630 = vmul.f32 %v624, %v620
        %v631 = vmul.f32 %v628, %v621
        %v632 = vadd.f32 %v617, %v630
        %v633 = vadd.f32 %v618, %v631
        %s634 = scalar_lea.vmem %s5, 288
        %v635 = vld [vmem:[%s634] sm:$0xff]
        %v636 = vld [vmem:[%s634 + $0x8] sm:$0xff]
        %637 = vset.pattern.permute.xlu0 18
        %638 = vperm.xlu0 %637, %v353
        %v639 = vpop.permute.xlu0 %638
        %641 = vset.pattern.permute.xlu0 18
        %642 = vperm.xlu0 %641, %v357
        %v643 = vpop.permute.xlu0 %642
        %v645 = vmul.f32 %v639, %v635
        %v646 = vmul.f32 %v643, %v636
        %v647 = vadd.f32 %v632, %v645
        %v648 = vadd.f32 %v633, %v646
        %s649 = scalar_lea.vmem %s5, 304
        %v650 = vld [vmem:[%s649] sm:$0xff]
        %v651 = vld [vmem:[%s649 + $0x8] sm:$0xff]
        %652 = vset.pattern.permute.xlu0 19
        %653 = vperm.xlu0 %652, %v353
        %v654 = vpop.permute.xlu0 %653
        %656 = vset.pattern.permute.xlu0 19
        %657 = vperm.xlu0 %656, %v357
        %v658 = vpop.permute.xlu0 %657
        %v660 = vmul.f32 %v654, %v650
        %v661 = vmul.f32 %v658, %v651
        %v662 = vadd.f32 %v647, %v660
        %v663 = vadd.f32 %v648, %v661
        %s664 = scalar_lea.vmem %s5, 320
        %v665 = vld [vmem:[%s664] sm:$0xff]
        %v666 = vld [vmem:[%s664 + $0x8] sm:$0xff]
        %667 = vset.pattern.permute.xlu0 20
        %668 = vperm.xlu0 %667, %v353
        %v669 = vpop.permute.xlu0 %668
        %671 = vset.pattern.permute.xlu0 20
        %672 = vperm.xlu0 %671, %v357
        %v673 = vpop.permute.xlu0 %672
        %v675 = vmul.f32 %v669, %v665
        %v676 = vmul.f32 %v673, %v666
        %v677 = vadd.f32 %v662, %v675
        %v678 = vadd.f32 %v663, %v676
        %s679 = scalar_lea.vmem %s5, 336
        %v680 = vld [vmem:[%s679] sm:$0xff]
        %v681 = vld [vmem:[%s679 + $0x8] sm:$0xff]
        %682 = vset.pattern.permute.xlu0 21
        %683 = vperm.xlu0 %682, %v353
        %v684 = vpop.permute.xlu0 %683
        %686 = vset.pattern.permute.xlu0 21
        %687 = vperm.xlu0 %686, %v357
        %v688 = vpop.permute.xlu0 %687
        %v690 = vmul.f32 %v684, %v680
        %v691 = vmul.f32 %v688, %v681
        %v692 = vadd.f32 %v677, %v690
        %v693 = vadd.f32 %v678, %v691
        %s694 = scalar_lea.vmem %s5, 352
        %v695 = vld [vmem:[%s694] sm:$0xff]
        %v696 = vld [vmem:[%s694 + $0x8] sm:$0xff]
        %697 = vset.pattern.permute.xlu0 22
        %698 = vperm.xlu0 %697, %v353
        %v699 = vpop.permute.xlu0 %698
        %701 = vset.pattern.permute.xlu0 22
        %702 = vperm.xlu0 %701, %v357
        %v703 = vpop.permute.xlu0 %702
        %v705 = vmul.f32 %v699, %v695
        %v706 = vmul.f32 %v703, %v696
        %v707 = vadd.f32 %v692, %v705
        %v708 = vadd.f32 %v693, %v706
        %s709 = scalar_lea.vmem %s5, 368
        %v710 = vld [vmem:[%s709] sm:$0xff]
        %v711 = vld [vmem:[%s709 + $0x8] sm:$0xff]
        %712 = vset.pattern.permute.xlu0 23
        %713 = vperm.xlu0 %712, %v353
        %v714 = vpop.permute.xlu0 %713
        %716 = vset.pattern.permute.xlu0 23
        %717 = vperm.xlu0 %716, %v357
        %v718 = vpop.permute.xlu0 %717
        %v720 = vmul.f32 %v714, %v710
        %v721 = vmul.f32 %v718, %v711
        %v722 = vadd.f32 %v707, %v720
        %v723 = vadd.f32 %v708, %v721
        %s724 = scalar_lea.vmem %s5, 384
        %v725 = vld [vmem:[%s724] sm:$0xff]
        %v726 = vld [vmem:[%s724 + $0x8] sm:$0xff]
        %727 = vset.pattern.permute.xlu0 24
        %728 = vperm.xlu0 %727, %v353
        %v729 = vpop.permute.xlu0 %728
        %731 = vset.pattern.permute.xlu0 24
        %732 = vperm.xlu0 %731, %v357
        %v733 = vpop.permute.xlu0 %732
        %v735 = vmul.f32 %v729, %v725
        %v736 = vmul.f32 %v733, %v726
        %v737 = vadd.f32 %v722, %v735
        %v738 = vadd.f32 %v723, %v736
        %s739 = scalar_lea.vmem %s5, 400
        %v740 = vld [vmem:[%s739] sm:$0xff]
        %v741 = vld [vmem:[%s739 + $0x8] sm:$0xff]
        %742 = vset.pattern.permute.xlu0 25
        %743 = vperm.xlu0 %742, %v353
        %v744 = vpop.permute.xlu0 %743
        %746 = vset.pattern.permute.xlu0 25
        %747 = vperm.xlu0 %746, %v357
        %v748 = vpop.permute.xlu0 %747
        %v750 = vmul.f32 %v744, %v740
        %v751 = vmul.f32 %v748, %v741
        %v752 = vadd.f32 %v737, %v750
        %v753 = vadd.f32 %v738, %v751
        %s754 = scalar_lea.vmem %s5, 416
        %v755 = vld [vmem:[%s754] sm:$0xff]
        %v756 = vld [vmem:[%s754 + $0x8] sm:$0xff]
        %757 = vset.pattern.permute.xlu0 26
        %758 = vperm.xlu0 %757, %v353
        %v759 = vpop.permute.xlu0 %758
        %761 = vset.pattern.permute.xlu0 26
        %762 = vperm.xlu0 %761, %v357
        %v763 = vpop.permute.xlu0 %762
        %v765 = vmul.f32 %v759, %v755
        %v766 = vmul.f32 %v763, %v756
        %v767 = vadd.f32 %v752, %v765
        %v768 = vadd.f32 %v753, %v766
        %s769 = scalar_lea.vmem %s5, 432
        %v770 = vld [vmem:[%s769] sm:$0xff]
        %v771 = vld [vmem:[%s769 + $0x8] sm:$0xff]
        %772 = vset.pattern.permute.xlu0 27
        %773 = vperm.xlu0 %772, %v353
        %v774 = vpop.permute.xlu0 %773
        %776 = vset.pattern.permute.xlu0 27
        %777 = vperm.xlu0 %776, %v357
        %v778 = vpop.permute.xlu0 %777
        %v780 = vmul.f32 %v774, %v770
        %v781 = vmul.f32 %v778, %v771
        %v782 = vadd.f32 %v767, %v780
        %v783 = vadd.f32 %v768, %v781
        %s784 = scalar_lea.vmem %s5, 448
        %v785 = vld [vmem:[%s784] sm:$0xff]
        %v786 = vld [vmem:[%s784 + $0x8] sm:$0xff]
        %787 = vset.pattern.permute.xlu0 28
        %788 = vperm.xlu0 %787, %v353
        %v789 = vpop.permute.xlu0 %788
        %791 = vset.pattern.permute.xlu0 28
        %792 = vperm.xlu0 %791, %v357
        %v793 = vpop.permute.xlu0 %792
        %v795 = vmul.f32 %v789, %v785
        %v796 = vmul.f32 %v793, %v786
        %v797 = vadd.f32 %v782, %v795
        %v798 = vadd.f32 %v783, %v796
        %s799 = scalar_lea.vmem %s5, 464
        %v800 = vld [vmem:[%s799] sm:$0xff]
        %v801 = vld [vmem:[%s799 + $0x8] sm:$0xff]
        %802 = vset.pattern.permute.xlu0 29
        %803 = vperm.xlu0 %802, %v353
        %v804 = vpop.permute.xlu0 %803
        %806 = vset.pattern.permute.xlu0 29
        %807 = vperm.xlu0 %806, %v357
        %v808 = vpop.permute.xlu0 %807
        %v810 = vmul.f32 %v804, %v800
        %v811 = vmul.f32 %v808, %v801
        %v812 = vadd.f32 %v797, %v810
        %v813 = vadd.f32 %v798, %v811
        %s814 = scalar_lea.vmem %s5, 480
        %v815 = vld [vmem:[%s814] sm:$0xff]
        %v816 = vld [vmem:[%s814 + $0x8] sm:$0xff]
        %817 = vset.pattern.permute.xlu0 30
        %818 = vperm.xlu0 %817, %v353
        %v819 = vpop.permute.xlu0 %818
        %821 = vset.pattern.permute.xlu0 30
        %822 = vperm.xlu0 %821, %v357
        %v823 = vpop.permute.xlu0 %822
        %v825 = vmul.f32 %v819, %v815
        %v826 = vmul.f32 %v823, %v816
        %v827 = vadd.f32 %v812, %v825
        %v828 = vadd.f32 %v813, %v826
        %s829 = scalar_lea.vmem %s5, 496
        %v830 = vld [vmem:[%s829] sm:$0xff]
        %v831 = vld [vmem:[%s829 + $0x8] sm:$0xff]
        %832 = vset.pattern.permute.xlu0 31
        %833 = vperm.xlu0 %832, %v353
        %v834 = vpop.permute.xlu0 %833
        %836 = vset.pattern.permute.xlu0 31
        %837 = vperm.xlu0 %836, %v357
        %v838 = vpop.permute.xlu0 %837
        %v840 = vmul.f32 %v834, %v830
        %v841 = vmul.f32 %v838, %v831
        %v842 = vadd.f32 %v827, %v840
        %v843 = vadd.f32 %v828, %v841
        %845 = vrot.lane.b32.xlu0 %v361, 64
        %v846 = vpop.permute.xlu0 %845
        %vm847 = vcmask 261120
        %v849 = vsel %vm847, %v361, 0
        %v852 = vsel %vm847, %v846, 0
        %854 = vmatprep.subr.bf16.mxu0 0
        %855 = vmatpush1.bf16.xpose.msra.mxu0 0
        %856 = vmatprep.subr.bf16.mxu0 0
        %857 = vmatpush1.bf16.xpose.msra.mxu0 0
        %858 = vmatprep.subr.bf16.mxu0 0
        %859 = vmatpush1.bf16.xpose.msra.mxu0 0
        %860 = vmatprep.subr.bf16.mxu0 0
        %861 = vmatpush1.bf16.xpose.msra.mxu0 0
        %862 = vmatprep.subr.bf16.mxu0 0
        %863 = vmatpush1.bf16.xpose.msra.mxu0 0
        %864 = vmatprep.subr.bf16.mxu0 0
        %865 = vmatpush1.bf16.xpose.msra.mxu0 0
        %866 = vmatprep.subr.bf16.mxu0 0
        %867 = vmatpush1.bf16.xpose.msra.mxu0 0
        %868 = vmatprep.subr.bf16.mxu0 0
        %869 = vmatpush1.bf16.xpose.msra.mxu0 %v852
        %870 = vmatprep.subr.bf16.mxu0 0
        %871 = vmatpush2.bf16.xpose.msra.mxu0 0
        %872 = vmatprep.subr.bf16.mxu0 0
        %873 = vmatpush2.bf16.xpose.msra.mxu0 0
        %874 = vmatprep.subr.bf16.mxu0 0
        %875 = vmatpush2.bf16.xpose.msra.mxu0 0
        %876 = vmatprep.subr.bf16.mxu0 0
        %877 = vmatpush2.bf16.xpose.msra.mxu0 0
        %878 = vmatprep.subr.bf16.mxu0 0
        %879 = vmatpush2.bf16.xpose.msra.mxu0 0
        %880 = vmatprep.subr.bf16.mxu0 0
        %881 = vmatpush2.bf16.xpose.msra.mxu0 0
        %882 = vmatprep.subr.bf16.mxu0 0
        %883 = vmatpush2.bf16.xpose.msra.mxu0 0
        %884 = vmatprep.subr.bf16.mxu0 0
        %885 = vmatpush2.bf16.xpose.msra.mxu0 0
        %886 = vmatprep.mubr.bf16.mxu0 0
        %887 = vmatmul.mubr.bf16.gmra.mxu0 %v849
        %v888 = vpop.f32.mrf.mxu0
        %v889 = vadd.f32 %v842, %v888
        %v890 = vpop.f32.mrf.mxu0
        %v891 = vpop.f32.mrf.mxu0
        %v892 = vadd.f32 %v843, %v891
        %v893 = vpop.f32.mrf.mxu0
        %894 = vdwg.mxu0
        %v895 = vmul.f32 %v889, 0.17677669
        %v896 = vmul.f32 %v892, 0.17677669
        %vm897 = vcmask 130048
        %v898 = vsel %vm897, %v895, -inf
        %899 = vmax.xlane.f32.xlu0 %v898
        %v900 = vpop.xlane.xlu0 %899
        %v901 = vsel %vm897, %v896, -inf
        %902 = vmax.xlane.f32.xlu0 %v901
        %v903 = vpop.xlane.xlu0 %902
        %v904 = vsub.f32 %v895, %v900
        %v905 = vsub.f32 %v896, %v903
        %v906 = vmul.f32 %v904, 1.442695
        %v907 = vpow.pop %v906
        %v908 = vmul.f32 %v905, 1.442695
        %v909 = vpow.pop %v908
        %v910 = vsel %vm897, %v907, 0.0
        %911 = vadd.xlane.f32.xlu0 %v910
        %v912 = vpop.xlane.xlu0 %911
        %v913 = vsel %vm897, %v909, 0.0
        %914 = vadd.xlane.f32.xlu0 %v913
        %v915 = vpop.xlane.xlu0 %914
        %v916 = vrcp.pop %v912
        %v917 = vrcp.pop %v915
        %v918 = vmul.f32 %v907, %v916
        %v919 = vmul.f32 %v909, %v917
        %v920 = vpack.c.bf16 %v919, %v918
        %v922 = vsel %vm897, %v920, 0
        %924 = vmatprep.subr.bf16.mxu0 0
        %925 = vmatpush1.bf16.msra.mxu0 0
        %926 = vmatprep.subr.bf16.mxu0 0
        %927 = vmatpush1.bf16.msra.mxu0 0
        %928 = vmatprep.subr.bf16.mxu0 0
        %929 = vmatpush1.bf16.msra.mxu0 0
        %930 = vmatprep.subr.bf16.mxu0 0
        %931 = vmatpush1.bf16.msra.mxu0 0
        %932 = vmatprep.subr.bf16.mxu0 0
        %933 = vmatpush1.bf16.msra.mxu0 0
        %934 = vmatprep.subr.bf16.mxu0 0
        %935 = vmatpush1.bf16.msra.mxu0 0
        %936 = vmatprep.subr.bf16.mxu0 0
        %937 = vmatpush1.bf16.msra.mxu0 0
        %938 = vmatprep.subr.bf16.mxu0 0
        %939 = vmatpush1.bf16.msra.mxu0 %v362
        %940 = vmatprep.subr.bf16.mxu0 0
        %941 = vmatpush2.bf16.msra.mxu0 0
        %942 = vmatprep.subr.bf16.mxu0 0
        %943 = vmatpush2.bf16.msra.mxu0 0
        %944 = vmatprep.subr.bf16.mxu0 0
        %945 = vmatpush2.bf16.msra.mxu0 0
        %946 = vmatprep.subr.bf16.mxu0 0
        %947 = vmatpush2.bf16.msra.mxu0 0
        %948 = vmatprep.subr.bf16.mxu0 0
        %949 = vmatpush2.bf16.msra.mxu0 0
        %950 = vmatprep.subr.bf16.mxu0 0
        %951 = vmatpush2.bf16.msra.mxu0 0
        %952 = vmatprep.subr.bf16.mxu0 0
        %953 = vmatpush2.bf16.msra.mxu0 0
        %954 = vmatprep.subr.bf16.mxu0 0
        %955 = vmatpush2.bf16.msra.mxu0 0
        %956 = vmatprep.mubr.bf16.mxu0 0
        %957 = vmatmul.mubr.bf16.gmra.mxu0 %v922
        %v958 = vpop.f32.mrf.mxu0
        %v959 = vadd.f32 0.0, %v958
        %v960 = vpop.f32.mrf.mxu0
        %v961 = vpop.f32.mrf.mxu0
        %v962 = vadd.f32 0.0, %v961
        %v963 = vpop.f32.mrf.mxu0
        %964 = vdwg.mxu0
        %v965 = vld [vmem:[%s3] sm:$0xf]
        %v966 = vld [vmem:[%s3 + $0x4] sm:$0xf]
        %v967 = vld [vmem:[%s3 + $0x8] sm:$0xf]
        %v968 = vld [vmem:[%s3 + $0xc] sm:$0xf]
        %v969 = vpack.c.bf16 %v962, %v959
        %970 = vset.pattern.permute.xlu0 32
        %971 = vperm.xlu0 %970, %v353
        %v972 = vpop.permute.xlu0 %971
        %974 = vset.pattern.permute.xlu0 32
        %975 = vperm.xlu0 %974, %v357
        %v976 = vpop.permute.xlu0 %975
        %v978 = vmul.f32 %v972, %v363
        %v979 = vmul.f32 %v976, %v364
        %v980 = vadd.f32 %v978, 0.0
        %v981 = vadd.f32 %v979, 0.0
        %982 = vset.pattern.permute.xlu0 33
        %983 = vperm.xlu0 %982, %v353
        %v984 = vpop.permute.xlu0 %983
        %986 = vset.pattern.permute.xlu0 33
        %987 = vperm.xlu0 %986, %v357
        %v988 = vpop.permute.xlu0 %987
        %v990 = vmul.f32 %v984, %v380
        %v991 = vmul.f32 %v988, %v381
        %v992 = vadd.f32 %v980, %v990
        %v993 = vadd.f32 %v981, %v991
        %994 = vset.pattern.permute.xlu0 34
        %995 = vperm.xlu0 %994, %v353
        %v996 = vpop.permute.xlu0 %995
        %998 = vset.pattern.permute.xlu0 34
        %999 = vperm.xlu0 %998, %v357
        %v1000 = vpop.permute.xlu0 %999
        %v1002 = vmul.f32 %v996, %v395
        %v1003 = vmul.f32 %v1000, %v396
        %v1004 = vadd.f32 %v992, %v1002
        %v1005 = vadd.f32 %v993, %v1003
        %1006 = vset.pattern.permute.xlu0 35
        %1007 = vperm.xlu0 %1006, %v353
        %v1008 = vpop.permute.xlu0 %1007
        %1010 = vset.pattern.permute.xlu0 35
        %1011 = vperm.xlu0 %1010, %v357
        %v1012 = vpop.permute.xlu0 %1011
        %v1014 = vmul.f32 %v1008, %v410
        %v1015 = vmul.f32 %v1012, %v411
        %v1016 = vadd.f32 %v1004, %v1014
        %v1017 = vadd.f32 %v1005, %v1015
        %1018 = vset.pattern.permute.xlu0 36
        %1019 = vperm.xlu0 %1018, %v353
        %v1020 = vpop.permute.xlu0 %1019
        %1022 = vset.pattern.permute.xlu0 36
        %1023 = vperm.xlu0 %1022, %v357
        %v1024 = vpop.permute.xlu0 %1023
        %v1026 = vmul.f32 %v1020, %v425
        %v1027 = vmul.f32 %v1024, %v426
        %v1028 = vadd.f32 %v1016, %v1026
        %v1029 = vadd.f32 %v1017, %v1027
        %1030 = vset.pattern.permute.xlu0 37
        %1031 = vperm.xlu0 %1030, %v353
        %v1032 = vpop.permute.xlu0 %1031
        %1034 = vset.pattern.permute.xlu0 37
        %1035 = vperm.xlu0 %1034, %v357
        %v1036 = vpop.permute.xlu0 %1035
        %v1038 = vmul.f32 %v1032, %v440
        %v1039 = vmul.f32 %v1036, %v441
        %v1040 = vadd.f32 %v1028, %v1038
        %v1041 = vadd.f32 %v1029, %v1039
        %1042 = vset.pattern.permute.xlu0 38
        %1043 = vperm.xlu0 %1042, %v353
        %v1044 = vpop.permute.xlu0 %1043
        %1046 = vset.pattern.permute.xlu0 38
        %1047 = vperm.xlu0 %1046, %v357
        %v1048 = vpop.permute.xlu0 %1047
        %v1050 = vmul.f32 %v1044, %v455
        %v1051 = vmul.f32 %v1048, %v456
        %v1052 = vadd.f32 %v1040, %v1050
        %v1053 = vadd.f32 %v1041, %v1051
        %1054 = vset.pattern.permute.xlu0 39
        %1055 = vperm.xlu0 %1054, %v353
        %v1056 = vpop.permute.xlu0 %1055
        %1058 = vset.pattern.permute.xlu0 39
        %1059 = vperm.xlu0 %1058, %v357
        %v1060 = vpop.permute.xlu0 %1059
        %v1062 = vmul.f32 %v1056, %v470
        %v1063 = vmul.f32 %v1060, %v471
        %v1064 = vadd.f32 %v1052, %v1062
        %v1065 = vadd.f32 %v1053, %v1063
        %1066 = vset.pattern.permute.xlu0 40
        %1067 = vperm.xlu0 %1066, %v353
        %v1068 = vpop.permute.xlu0 %1067
        %1070 = vset.pattern.permute.xlu0 40
        %1071 = vperm.xlu0 %1070, %v357
        %v1072 = vpop.permute.xlu0 %1071
        %v1074 = vmul.f32 %v1068, %v485
        %v1075 = vmul.f32 %v1072, %v486
        %v1076 = vadd.f32 %v1064, %v1074
        %v1077 = vadd.f32 %v1065, %v1075
        %1078 = vset.pattern.permute.xlu0 41
        %1079 = vperm.xlu0 %1078, %v353
        %v1080 = vpop.permute.xlu0 %1079
        %1082 = vset.pattern.permute.xlu0 41
        %1083 = vperm.xlu0 %1082, %v357
        %v1084 = vpop.permute.xlu0 %1083
        %v1086 = vmul.f32 %v1080, %v500
        %v1087 = vmul.f32 %v1084, %v501
        %v1088 = vadd.f32 %v1076, %v1086
        %v1089 = vadd.f32 %v1077, %v1087
        %1090 = vset.pattern.permute.xlu0 42
        %1091 = vperm.xlu0 %1090, %v353
        %v1092 = vpop.permute.xlu0 %1091
        %1094 = vset.pattern.permute.xlu0 42
        %1095 = vperm.xlu0 %1094, %v357
        %v1096 = vpop.permute.xlu0 %1095
        %v1098 = vmul.f32 %v1092, %v515
        %v1099 = vmul.f32 %v1096, %v516
        %v1100 = vadd.f32 %v1088, %v1098
        %v1101 = vadd.f32 %v1089, %v1099
        %1102 = vset.pattern.permute.xlu0 43
        %1103 = vperm.xlu0 %1102, %v353
        %v1104 = vpop.permute.xlu0 %1103
        %1106 = vset.pattern.permute.xlu0 43
        %1107 = vperm.xlu0 %1106, %v357
        %v1108 = vpop.permute.xlu0 %1107
        %v1110 = vmul.f32 %v1104, %v530
        %v1111 = vmul.f32 %v1108, %v531
        %v1112 = vadd.f32 %v1100, %v1110
        %v1113 = vadd.f32 %v1101, %v1111
        %1114 = vset.pattern.permute.xlu0 44
        %1115 = vperm.xlu0 %1114, %v353
        %v1116 = vpop.permute.xlu0 %1115
        %1118 = vset.pattern.permute.xlu0 44
        %1119 = vperm.xlu0 %1118, %v357
        %v1120 = vpop.permute.xlu0 %1119
        %v1122 = vmul.f32 %v1116, %v545
        %v1123 = vmul.f32 %v1120, %v546
        %v1124 = vadd.f32 %v1112, %v1122
        %v1125 = vadd.f32 %v1113, %v1123
        %1126 = vset.pattern.permute.xlu0 45
        %1127 = vperm.xlu0 %1126, %v353
        %v1128 = vpop.permute.xlu0 %1127
        %1130 = vset.pattern.permute.xlu0 45
        %1131 = vperm.xlu0 %1130, %v357
        %v1132 = vpop.permute.xlu0 %1131
        %v1134 = vmul.f32 %v1128, %v560
        %v1135 = vmul.f32 %v1132, %v561
        %v1136 = vadd.f32 %v1124, %v1134
        %v1137 = vadd.f32 %v1125, %v1135
        %1138 = vset.pattern.permute.xlu0 46
        %1139 = vperm.xlu0 %1138, %v353
        %v1140 = vpop.permute.xlu0 %1139
        %1142 = vset.pattern.permute.xlu0 46
        %1143 = vperm.xlu0 %1142, %v357
        %v1144 = vpop.permute.xlu0 %1143
        %v1146 = vmul.f32 %v1140, %v575
        %v1147 = vmul.f32 %v1144, %v576
        %v1148 = vadd.f32 %v1136, %v1146
        %v1149 = vadd.f32 %v1137, %v1147
        %1150 = vset.pattern.permute.xlu0 47
        %1151 = vperm.xlu0 %1150, %v353
        %v1152 = vpop.permute.xlu0 %1151
        %1154 = vset.pattern.permute.xlu0 47
        %1155 = vperm.xlu0 %1154, %v357
        %v1156 = vpop.permute.xlu0 %1155
        %v1158 = vmul.f32 %v1152, %v590
        %v1159 = vmul.f32 %v1156, %v591
        %v1160 = vadd.f32 %v1148, %v1158
        %v1161 = vadd.f32 %v1149, %v1159
        %1162 = vset.pattern.permute.xlu0 48
        %1163 = vperm.xlu0 %1162, %v353
        %v1164 = vpop.permute.xlu0 %1163
        %1166 = vset.pattern.permute.xlu0 48
        %1167 = vperm.xlu0 %1166, %v357
        %v1168 = vpop.permute.xlu0 %1167
        %v1170 = vmul.f32 %v1164, %v605
        %v1171 = vmul.f32 %v1168, %v606
        %v1172 = vadd.f32 %v1160, %v1170
        %v1173 = vadd.f32 %v1161, %v1171
        %1174 = vset.pattern.permute.xlu0 49
        %1175 = vperm.xlu0 %1174, %v353
        %v1176 = vpop.permute.xlu0 %1175
        %1178 = vset.pattern.permute.xlu0 49
        %1179 = vperm.xlu0 %1178, %v357
        %v1180 = vpop.permute.xlu0 %1179
        %v1182 = vmul.f32 %v1176, %v620
        %v1183 = vmul.f32 %v1180, %v621
        %v1184 = vadd.f32 %v1172, %v1182
        %v1185 = vadd.f32 %v1173, %v1183
        %1186 = vset.pattern.permute.xlu0 50
        %1187 = vperm.xlu0 %1186, %v353
        %v1188 = vpop.permute.xlu0 %1187
        %1190 = vset.pattern.permute.xlu0 50
        %1191 = vperm.xlu0 %1190, %v357
        %v1192 = vpop.permute.xlu0 %1191
        %v1194 = vmul.f32 %v1188, %v635
        %v1195 = vmul.f32 %v1192, %v636
        %v1196 = vadd.f32 %v1184, %v1194
        %v1197 = vadd.f32 %v1185, %v1195
        %1198 = vset.pattern.permute.xlu0 51
        %1199 = vperm.xlu0 %1198, %v353
        %v1200 = vpop.permute.xlu0 %1199
        %1202 = vset.pattern.permute.xlu0 51
        %1203 = vperm.xlu0 %1202, %v357
        %v1204 = vpop.permute.xlu0 %1203
        %v1206 = vmul.f32 %v1200, %v650
        %v1207 = vmul.f32 %v1204, %v651
        %v1208 = vadd.f32 %v1196, %v1206
        %v1209 = vadd.f32 %v1197, %v1207
        %1210 = vset.pattern.permute.xlu0 52
        %1211 = vperm.xlu0 %1210, %v353
        %v1212 = vpop.permute.xlu0 %1211
        %1214 = vset.pattern.permute.xlu0 52
        %1215 = vperm.xlu0 %1214, %v357
        %v1216 = vpop.permute.xlu0 %1215
        %v1218 = vmul.f32 %v1212, %v665
        %v1219 = vmul.f32 %v1216, %v666
        %v1220 = vadd.f32 %v1208, %v1218
        %v1221 = vadd.f32 %v1209, %v1219
        %1222 = vset.pattern.permute.xlu0 53
        %1223 = vperm.xlu0 %1222, %v353
        %v1224 = vpop.permute.xlu0 %1223
        %1226 = vset.pattern.permute.xlu0 53
        %1227 = vperm.xlu0 %1226, %v357
        %v1228 = vpop.permute.xlu0 %1227
        %v1230 = vmul.f32 %v1224, %v680
        %v1231 = vmul.f32 %v1228, %v681
        %v1232 = vadd.f32 %v1220, %v1230
        %v1233 = vadd.f32 %v1221, %v1231
        %1234 = vset.pattern.permute.xlu0 54
        %1235 = vperm.xlu0 %1234, %v353
        %v1236 = vpop.permute.xlu0 %1235
        %1238 = vset.pattern.permute.xlu0 54
        %1239 = vperm.xlu0 %1238, %v357
        %v1240 = vpop.permute.xlu0 %1239
        %v1242 = vmul.f32 %v1236, %v695
        %v1243 = vmul.f32 %v1240, %v696
        %v1244 = vadd.f32 %v1232, %v1242
        %v1245 = vadd.f32 %v1233, %v1243
        %1246 = vset.pattern.permute.xlu0 55
        %1247 = vperm.xlu0 %1246, %v353
        %v1248 = vpop.permute.xlu0 %1247
        %1250 = vset.pattern.permute.xlu0 55
        %1251 = vperm.xlu0 %1250, %v357
        %v1252 = vpop.permute.xlu0 %1251
        %v1254 = vmul.f32 %v1248, %v710
        %v1255 = vmul.f32 %v1252, %v711
        %v1256 = vadd.f32 %v1244, %v1254
        %v1257 = vadd.f32 %v1245, %v1255
        %1258 = vset.pattern.permute.xlu0 56
        %1259 = vperm.xlu0 %1258, %v353
        %v1260 = vpop.permute.xlu0 %1259
        %1262 = vset.pattern.permute.xlu0 56
        %1263 = vperm.xlu0 %1262, %v357
        %v1264 = vpop.permute.xlu0 %1263
        %v1266 = vmul.f32 %v1260, %v725
        %v1267 = vmul.f32 %v1264, %v726
        %v1268 = vadd.f32 %v1256, %v1266
        %v1269 = vadd.f32 %v1257, %v1267
        %1270 = vset.pattern.permute.xlu0 57
        %1271 = vperm.xlu0 %1270, %v353
        %v1272 = vpop.permute.xlu0 %1271
        %1274 = vset.pattern.permute.xlu0 57
        %1275 = vperm.xlu0 %1274, %v357
        %v1276 = vpop.permute.xlu0 %1275
        %v1278 = vmul.f32 %v1272, %v740
        %v1279 = vmul.f32 %v1276, %v741
        %v1280 = vadd.f32 %v1268, %v1278
        %v1281 = vadd.f32 %v1269, %v1279
        %1282 = vset.pattern.permute.xlu0 58
        %1283 = vperm.xlu0 %1282, %v353
        %v1284 = vpop.permute.xlu0 %1283
        %1286 = vset.pattern.permute.xlu0 58
        %1287 = vperm.xlu0 %1286, %v357
        %v1288 = vpop.permute.xlu0 %1287
        %v1290 = vmul.f32 %v1284, %v755
        %v1291 = vmul.f32 %v1288, %v756
        %v1292 = vadd.f32 %v1280, %v1290
        %v1293 = vadd.f32 %v1281, %v1291
        %1294 = vset.pattern.permute.xlu0 59
        %1295 = vperm.xlu0 %1294, %v353
        %v1296 = vpop.permute.xlu0 %1295
        %1298 = vset.pattern.permute.xlu0 59
        %1299 = vperm.xlu0 %1298, %v357
        %v1300 = vpop.permute.xlu0 %1299
        %v1302 = vmul.f32 %v1296, %v770
        %v1303 = vmul.f32 %v1300, %v771
        %v1304 = vadd.f32 %v1292, %v1302
        %v1305 = vadd.f32 %v1293, %v1303
        %1306 = vset.pattern.permute.xlu0 60
        %1307 = vperm.xlu0 %1306, %v353
        %v1308 = vpop.permute.xlu0 %1307
        %1310 = vset.pattern.permute.xlu0 60
        %1311 = vperm.xlu0 %1310, %v357
        %v1312 = vpop.permute.xlu0 %1311
        %v1314 = vmul.f32 %v1308, %v785
        %v1315 = vmul.f32 %v1312, %v786
        %v1316 = vadd.f32 %v1304, %v1314
        %v1317 = vadd.f32 %v1305, %v1315
        %1318 = vset.pattern.permute.xlu0 61
        %1319 = vperm.xlu0 %1318, %v353
        %v1320 = vpop.permute.xlu0 %1319
        %1322 = vset.pattern.permute.xlu0 61
        %1323 = vperm.xlu0 %1322, %v357
        %v1324 = vpop.permute.xlu0 %1323
        %v1326 = vmul.f32 %v1320, %v800
        %v1327 = vmul.f32 %v1324, %v801
        %v1328 = vadd.f32 %v1316, %v1326
        %v1329 = vadd.f32 %v1317, %v1327
        %1330 = vset.pattern.permute.xlu0 62
        %1331 = vperm.xlu0 %1330, %v353
        %v1332 = vpop.permute.xlu0 %1331
        %1334 = vset.pattern.permute.xlu0 62
        %1335 = vperm.xlu0 %1334, %v357
        %v1336 = vpop.permute.xlu0 %1335
        %v1338 = vmul.f32 %v1332, %v815
        %v1339 = vmul.f32 %v1336, %v816
        %v1340 = vadd.f32 %v1328, %v1338
        %v1341 = vadd.f32 %v1329, %v1339
        %1342 = vset.pattern.permute.xlu0 63
        %1343 = vperm.xlu0 %1342, %v353
        %v1344 = vpop.permute.xlu0 %1343
        %1346 = vset.pattern.permute.xlu0 63
        %1347 = vperm.xlu0 %1346, %v357
        %v1348 = vpop.permute.xlu0 %1347
        %v1350 = vmul.f32 %v1344, %v830
        %v1351 = vmul.f32 %v1348, %v831
        %v1352 = vadd.f32 %v1340, %v1350
        %v1353 = vadd.f32 %v1341, %v1351
        %1354 = vrot.lane.b32.xlu0 %v361, 96
        %v1355 = vpop.permute.xlu0 %1354
        %1356 = vrot.lane.b32.xlu0 %v361, 32
        %v1357 = vpop.permute.xlu0 %1356
        %v1359 = vsel %vm847, %v1355, 0
        %v1362 = vsel %vm847, %v1357, 0
        %1364 = vmatprep.subr.bf16.mxu0 0
        %1365 = vmatpush1.bf16.xpose.msra.mxu0 0
        %1366 = vmatprep.subr.bf16.mxu0 0
        %1367 = vmatpush1.bf16.xpose.msra.mxu0 0
        %1368 = vmatprep.subr.bf16.mxu0 0
        %1369 = vmatpush1.bf16.xpose.msra.mxu0 0
        %1370 = vmatprep.subr.bf16.mxu0 0
        %1371 = vmatpush1.bf16.xpose.msra.mxu0 0
        %1372 = vmatprep.subr.bf16.mxu0 0
        %1373 = vmatpush1.bf16.xpose.msra.mxu0 0
        %1374 = vmatprep.subr.bf16.mxu0 0
        %1375 = vmatpush1.bf16.xpose.msra.mxu0 0
        %1376 = vmatprep.subr.bf16.mxu0 0
        %1377 = vmatpush1.bf16.xpose.msra.mxu0 0
        %1378 = vmatprep.subr.bf16.mxu0 0
        %1379 = vmatpush1.bf16.xpose.msra.mxu0 %v1362
        %1380 = vmatprep.subr.bf16.mxu0 0
        %1381 = vmatpush2.bf16.xpose.msra.mxu0 0
        %1382 = vmatprep.subr.bf16.mxu0 0
        %1383 = vmatpush2.bf16.xpose.msra.mxu0 0
        %1384 = vmatprep.subr.bf16.mxu0 0
        %1385 = vmatpush2.bf16.xpose.msra.mxu0 0
        %1386 = vmatprep.subr.bf16.mxu0 0
        %1387 = vmatpush2.bf16.xpose.msra.mxu0 0
        %1388 = vmatprep.subr.bf16.mxu0 0
        %1389 = vmatpush2.bf16.xpose.msra.mxu0 0
        %1390 = vmatprep.subr.bf16.mxu0 0
        %1391 = vmatpush2.bf16.xpose.msra.mxu0 0
        %1392 = vmatprep.subr.bf16.mxu0 0
        %1393 = vmatpush2.bf16.xpose.msra.mxu0 0
        %1394 = vmatprep.subr.bf16.mxu0 0
        %1395 = vmatpush2.bf16.xpose.msra.mxu0 0
        %1396 = vmatprep.mubr.bf16.mxu0 0
        %1397 = vmatmul.mubr.bf16.gmra.mxu0 %v1359
        %v1398 = vpop.f32.mrf.mxu0
        %v1399 = vadd.f32 %v1352, %v1398
        %v1400 = vpop.f32.mrf.mxu0
        %v1401 = vpop.f32.mrf.mxu0
        %v1402 = vadd.f32 %v1353, %v1401
        %v1403 = vpop.f32.mrf.mxu0
        %1404 = vdwg.mxu0
        %v1405 = vmul.f32 %v1399, 0.17677669
        %v1406 = vmul.f32 %v1402, 0.17677669
        %v1407 = vsel %vm897, %v1405, -inf
        %1408 = vmax.xlane.f32.xlu0 %v1407
        %v1409 = vpop.xlane.xlu0 %1408
        %v1410 = vsel %vm897, %v1406, -inf
        %1411 = vmax.xlane.f32.xlu0 %v1410
        %v1412 = vpop.xlane.xlu0 %1411
        %v1413 = vsub.f32 %v1405, %v1409
        %v1414 = vsub.f32 %v1406, %v1412
        %v1415 = vmul.f32 %v1413, 1.442695
        %v1416 = vpow.pop %v1415
        %v1417 = vmul.f32 %v1414, 1.442695
        %v1418 = vpow.pop %v1417
        %v1419 = vsel %vm897, %v1416, 0.0
        %1420 = vadd.xlane.f32.xlu0 %v1419
        %v1421 = vpop.xlane.xlu0 %1420
        %v1422 = vsel %vm897, %v1418, 0.0
        %1423 = vadd.xlane.f32.xlu0 %v1422
        %v1424 = vpop.xlane.xlu0 %1423
        %v1425 = vrcp.pop %v1421
        %v1426 = vrcp.pop %v1424
        %v1427 = vmul.f32 %v1416, %v1425
        %v1428 = vmul.f32 %v1418, %v1426
        %v1429 = vpack.c.bf16 %v1428, %v1427
        %1431 = vrot.lane.b32.xlu0 %v362, 96
        %v1432 = vpop.permute.xlu0 %1431
        %v1435 = vsel %vm897, %v1429, 0
        %1437 = vmatprep.subr.bf16.mxu0 0
        %1438 = vmatpush1.bf16.msra.mxu0 0
        %1439 = vmatprep.subr.bf16.mxu0 0
        %1440 = vmatpush1.bf16.msra.mxu0 0
        %1441 = vmatprep.subr.bf16.mxu0 0
        %1442 = vmatpush1.bf16.msra.mxu0 0
        %1443 = vmatprep.subr.bf16.mxu0 0
        %1444 = vmatpush1.bf16.msra.mxu0 0
        %1445 = vmatprep.subr.bf16.mxu0 0
        %1446 = vmatpush1.bf16.msra.mxu0 0
        %1447 = vmatprep.subr.bf16.mxu0 0
        %1448 = vmatpush1.bf16.msra.mxu0 0
        %1449 = vmatprep.subr.bf16.mxu0 0
        %1450 = vmatpush1.bf16.msra.mxu0 0
        %1451 = vmatprep.subr.bf16.mxu0 0
        %1452 = vmatpush1.bf16.msra.mxu0 %v1432
        %1453 = vmatprep.subr.bf16.mxu0 0
        %1454 = vmatpush2.bf16.msra.mxu0 0
        %1455 = vmatprep.subr.bf16.mxu0 0
        %1456 = vmatpush2.bf16.msra.mxu0 0
        %1457 = vmatprep.subr.bf16.mxu0 0
        %1458 = vmatpush2.bf16.msra.mxu0 0
        %1459 = vmatprep.subr.bf16.mxu0 0
        %1460 = vmatpush2.bf16.msra.mxu0 0
        %1461 = vmatprep.subr.bf16.mxu0 0
        %1462 = vmatpush2.bf16.msra.mxu0 0
        %1463 = vmatprep.subr.bf16.mxu0 0
        %1464 = vmatpush2.bf16.msra.mxu0 0
        %1465 = vmatprep.subr.bf16.mxu0 0
        %1466 = vmatpush2.bf16.msra.mxu0 0
        %1467 = vmatprep.subr.bf16.mxu0 0
        %1468 = vmatpush2.bf16.msra.mxu0 0
        %1469 = vmatprep.mubr.bf16.mxu0 0
        %1470 = vmatmul.mubr.bf16.gmra.mxu0 %v1435
        %v1471 = vpop.f32.mrf.mxu0
        %v1472 = vadd.f32 0.0, %v1471
        %v1473 = vpop.f32.mrf.mxu0
        %v1474 = vpop.f32.mrf.mxu0
        %v1475 = vadd.f32 0.0, %v1474
        %v1476 = vpop.f32.mrf.mxu0
        %1477 = vdwg.mxu0
        %v1478 = vld [vmem:[%s3 + $0x10] sm:$0xf]
        %v1479 = vld [vmem:[%s3 + $0x14] sm:$0xf]
        %v1480 = vld [vmem:[%s3 + $0x18] sm:$0xf]
        %v1481 = vld [vmem:[%s3 + $0x1c] sm:$0xf]
        %v1482 = vpack.c.bf16 %v1475, %v1472
        %v1487 = vunpack.c.l.b16 %v1478
        %v1488 = vunpack.c.l.b16 %v1479
        %v1489 = vunpack.c.l.b16 %v1480
        %v1490 = vunpack.c.l.b16 %v1481
        %v1491 = vpack.c.b16 %v1488, %v1487
        %v1492 = vpack.c.b16 %v1490, %v1489
        %v1496 = vsel %vm847, %v1482, 0
        %1498 = vmatprep.subr.bf16.mxu0 0
        %1499 = vmatpush1.bf16.msra.mxu0 0
        %1500 = vmatprep.subr.bf16.mxu0 0
        %1501 = vmatpush1.bf16.msra.mxu0 0
        %1502 = vmatprep.subr.bf16.mxu0 0
        %1503 = vmatpush1.bf16.msra.mxu0 0
        %1504 = vmatprep.subr.bf16.mxu0 0
        %1505 = vmatpush1.bf16.msra.mxu0 0
        %1506 = vmatprep.subr.bf16.mxu0 0
        %1507 = vmatpush1.bf16.msra.mxu0 0
        %1508 = vmatprep.subr.bf16.mxu0 0
        %1509 = vmatpush1.bf16.msra.mxu0 0
        %1510 = vmatprep.subr.bf16.mxu0 0
        %1511 = vmatpush1.bf16.msra.mxu0 %v1492
        %1512 = vmatprep.subr.bf16.mxu0 0
        %1513 = vmatpush1.bf16.msra.mxu0 %v1491
        %1514 = vmatprep.subr.bf16.mxu0 0
        %1515 = vmatpush2.bf16.msra.mxu0 0
        %1516 = vmatprep.subr.bf16.mxu0 0
        %1517 = vmatpush2.bf16.msra.mxu0 0
        %1518 = vmatprep.subr.bf16.mxu0 0
        %1519 = vmatpush2.bf16.msra.mxu0 0
        %1520 = vmatprep.subr.bf16.mxu0 0
        %1521 = vmatpush2.bf16.msra.mxu0 0
        %1522 = vmatprep.subr.bf16.mxu0 0
        %1523 = vmatpush2.bf16.msra.mxu0 0
        %1524 = vmatprep.subr.bf16.mxu0 0
        %1525 = vmatpush2.bf16.msra.mxu0 0
        %1526 = vmatprep.subr.bf16.mxu0 0
        %1527 = vmatpush2.bf16.msra.mxu0 0
        %1528 = vmatprep.subr.bf16.mxu0 0
        %1529 = vmatpush2.bf16.msra.mxu0 0
        %1530 = vmatprep.mubr.bf16.mxu0 0
        %1531 = vmatmul.mubr.bf16.gmra.mxu0 %v1496
        %v1532 = vpop.f32.mrf.mxu0
        %v1533 = vadd.f32 0.0, %v1532
        %v1534 = vpop.f32.mrf.mxu0
        %v1535 = vpop.f32.mrf.mxu0
        %v1536 = vadd.f32 0.0, %v1535
        %v1537 = vpop.f32.mrf.mxu0
        %1538 = vdwg.mxu0
        %v1543 = vunpack.c.l.b16 %v965
        %v1544 = vunpack.c.l.b16 %v966
        %v1545 = vunpack.c.l.b16 %v967
        %v1546 = vunpack.c.l.b16 %v968
        %v1547 = vpack.c.b16 %v1544, %v1543
        %v1548 = vpack.c.b16 %v1546, %v1545
        %v1552 = vsel %vm847, %v969, 0
        %1554 = vmatprep.subr.bf16.mxu0 0
        %1555 = vmatpush1.bf16.msra.mxu0 0
        %1556 = vmatprep.subr.bf16.mxu0 0
        %1557 = vmatpush1.bf16.msra.mxu0 0
        %1558 = vmatprep.subr.bf16.mxu0 0
        %1559 = vmatpush1.bf16.msra.mxu0 0
        %1560 = vmatprep.subr.bf16.mxu0 0
        %1561 = vmatpush1.bf16.msra.mxu0 0
        %1562 = vmatprep.subr.bf16.mxu0 0
        %1563 = vmatpush1.bf16.msra.mxu0 0
        %1564 = vmatprep.subr.bf16.mxu0 0
        %1565 = vmatpush1.bf16.msra.mxu0 0
        %1566 = vmatprep.subr.bf16.mxu0 0
        %1567 = vmatpush1.bf16.msra.mxu0 %v1548
        %1568 = vmatprep.subr.bf16.mxu0 0
        %1569 = vmatpush1.bf16.msra.mxu0 %v1547
        %1570 = vmatprep.subr.bf16.mxu0 0
        %1571 = vmatpush2.bf16.msra.mxu0 0
        %1572 = vmatprep.subr.bf16.mxu0 0
        %1573 = vmatpush2.bf16.msra.mxu0 0
        %1574 = vmatprep.subr.bf16.mxu0 0
        %1575 = vmatpush2.bf16.msra.mxu0 0
        %1576 = vmatprep.subr.bf16.mxu0 0
        %1577 = vmatpush2.bf16.msra.mxu0 0
        %1578 = vmatprep.subr.bf16.mxu0 0
        %1579 = vmatpush2.bf16.msra.mxu0 0
        %1580 = vmatprep.subr.bf16.mxu0 0
        %1581 = vmatpush2.bf16.msra.mxu0 0
        %1582 = vmatprep.subr.bf16.mxu0 0
        %1583 = vmatpush2.bf16.msra.mxu0 0
        %1584 = vmatprep.subr.bf16.mxu0 0
        %1585 = vmatpush2.bf16.msra.mxu0 0
        %1586 = vmatprep.mubr.bf16.mxu0 0
        %1587 = vmatmul.mubr.bf16.gmra.mxu0 %v1552
        %v1588 = vpop.f32.mrf.mxu0
        %v1589 = vadd.f32 %v1533, %v1588
        %v1590 = vpop.f32.mrf.mxu0
        %v1591 = vpop.f32.mrf.mxu0
        %v1592 = vadd.f32 %v1536, %v1591
        %v1593 = vpop.f32.mrf.mxu0
        %1594 = vdwg.mxu0
        %v1595 = vld [vmem:[%s4] sm:$0x1]
        %v1597 = vlaneseq
        %v1598 = vshrl.u32 %v1597, 7
        %v1599 = vsub.s32 0, %v1598
        %v1600 = vrot.slane %v1595, %v1599
        %v1602 = vadd.f32 %v1589, %v1600
        %v1603 = vadd.f32 %v1592, %v1600
        %1604 = vst.msk [vmem:[%s244] sm:$0xff] %vm314, %v1602
        %1605 = vst.msk [vmem:[%s244 + $0x8] sm:$0xff] %vm314, %v1603
        %s1606 = sand.u32 %s159, 1
        %s1607 = scalar_lea.sflag [#allocation3], %s1606
        %s1608 = sand.u32 %s159, 1
        %s1609 = smul.addr %s1608, 16
        %s1610 = scalar_lea.vmem [#allocation2], %s1609
        // Predicated region
        $region45: #{tpu_custom_call.1} parent=43 // pred_check
          %p1611 = pneg %p169
        $region46: #{tpu_custom_call.1} parent=43 // pred_check_branch
          %1613 = sbr.rel (%p1611) target = $region48
        $region47: #{tpu_custom_call.1} parent=43 // pred_region
          %s1615 = ssub.s32 256, 256
          %1616 = vsyncadd %s1607, %s1615
          %s1617 = smul.addr %s20, 2
          %s1618 = smul.addr %s1617, 128
          %s1619 = scalar_lea.hbm %s6, %s1618
          %s1620 = sshll.u32 %s1610, 4
          %s1621 = int_to_ptr.vmem [resolvable:$true] %s1620
          %1626 = dma.vmem_to_hbm [thread:$0]  %s1621, 256, %s1619, %s1607, 128, 128, 8
        $region48: #{tpu_custom_call.1} parent=43 // pred_fallthru
          _
      $region44: #{tpu_custom_call.1} parent=5 // pred_fallthru
        _
      %p1627 = scmp.le.s32.totalorder 2, %s15
      // Predicated region
      $region49: #{tpu_custom_call.1} parent=5 // pred_check
        %p1628 = pneg %p1627
      $region50: #{tpu_custom_call.1} parent=5 // pred_check_branch
        %1630 = sbr.rel (%p1628) target = $region52
      $region51: #{tpu_custom_call.1} parent=5 // pred_region
        %s1631 = ssub.s32 %s15, 2
        // Predicated region
        $region53: #{tpu_custom_call.1} parent=51 // pred_check
          %p1632 = pneg %p175
        $region54: #{tpu_custom_call.1} parent=51 // pred_check_branch
          %1634 = sbr.rel (%p1632) target = $region56
        $region55: #{tpu_custom_call.1} parent=51 // pred_region
          %s1635 = sand.u32 %s160, 1
          %s1636 = scalar_lea.sflag [#allocation3], %s1635
          %s1637 = sand.u32 %s160, 1
          %s1638 = smul.addr %s1637, 16
          %s1639 = scalar_lea.vmem [#allocation2], %s1638
          %1640 = dma.done %s1636, 256
        $region56: #{tpu_custom_call.1} parent=51 // pred_fallthru
          _
      $region52: #{tpu_custom_call.1} parent=5 // pred_fallthru
        _
    $region6: #{tpu_custom_call.1} parent=1 // loop_footer
      %s19 = sadd.s32 1, %s15
    $region7: #{tpu_custom_call.1} parent=1 // loop_footer_branch
      %14 = sbr.rel target = $region3
    $region8: #{tpu_custom_call.1} parent=1 // loop_exit
      _
    %1641 = vsyncpa [#allocation3], 1
    %s1642 = scalar_lea.sflag [#allocation3], 1
    %1643 = vsyncpa %s1642, 1

</llo_original>
